<compile_context>
chip_gen: v7x
topology: tpu7x:2x2x1
jax: 0.10.0
libtpu: 0.0.40
codegen_flags: <defaults>
</compile_context>

<pallas_src>
import functools

import jax
import jax.numpy as jnp
from jax.experimental import pallas as pl
from jax.experimental.pallas import tpu as pltpu


def _lm_kernel(ids_ref,      # (T*B_pad, 1)  int32 VMEM, time-major rows, pad rows = -1
               xw_ref,       # (V, 4H)       bf16  VMEM, emb @ W_ih (g-block pre-scaled x2)
               b_ref,        # (1, 4H)       f32   VMEM, b_ih + b_hh (g-block pre-scaled x2)
               w_hh_ref,     # (H, 4H)       bf16  VMEM (g-block pre-scaled x2)
               w_fc_ref,     # (H, Vp)       f32   VMEM
               b_fc_ref,     # (1, Vp)       f32   VMEM
               out_ref,      # (T*B_pad, Vp) f32   VMEM, time-major rows
               xproj_x,      # (T*B_pad, 4H) f32   scratch: x @ W_ih + b
               hid_x,        # (T*B_pad, H)  f32   scratch: hidden states
               *, T, B_pad, H):
    rows = ids_ref.shape[0]
    V = xw_ref.shape[0]

    # ---- Embedding + input projection, fused & fully vectorized.
    # One-hot(ids) @ (emb @ W_ih) selects the precomputed per-token input
    # projection for every (t, b) row in a single bf16 MXU matmul.  Pad rows
    # carry id == -1, so their one-hot row is all zeros (they are row-wise
    # independent everywhere below and get sliced off in the wrapper).
    lane_ids = jax.lax.broadcasted_iota(jnp.int32, (rows, V), 1)
    onehot = jnp.where(lane_ids == ids_ref[...], 1.0, 0.0).astype(jnp.bfloat16)
    xproj_x[...] = jnp.dot(onehot, xw_ref[...],
                           preferred_element_type=jnp.float32) + b_ref[...]

    # ---- LSTM recurrence (PyTorch gate order i, f, g, o).
    # w_hh is loaded once (bf16) outside the unrolled loop so it can stay
    # resident across steps; the per-step (8 x H x 4H) matmul runs on the MXU
    # in bf16 with f32 accumulation.  The g-gate columns of W_ih / W_hh / b
    # were pre-scaled by 2 in the wrapper, so a single sigmoid over the whole
    # (B_pad, 4H) gate tile yields sigmoid(pre) for i/f/o and
    # tanh(pre_g) = 2*sigmoid(2*pre_g) - 1 for g (one EUP pass per step).
    # TODO(synk): hold the (H, 4H) RHS truly MXU-stationary across steps with
    # pltpu.matmul_push_rhs / matmul_acc_lhs / matmul_pop (largest win on v7x's MRB).
    w_hh = w_hh_ref[...]
    h = jnp.zeros((B_pad, H), jnp.float32)
    c = jnp.zeros((B_pad, H), jnp.float32)
    for t in range(T):                            # T is small -> static unroll
        row = t * B_pad
        gates = xproj_x[row:row + B_pad, :] + jnp.dot(
            h.astype(jnp.bfloat16), w_hh, preferred_element_type=jnp.float32)
        s = jax.nn.sigmoid(gates)                 # one EUP pass over (8, 4H)
        i = s[:, 0:H]
        f = s[:, H:2 * H]
        g = 2.0 * s[:, 2 * H:3 * H] - 1.0         # == tanh of the raw g pre-act
        o = s[:, 3 * H:4 * H]
        c = f * c + i * g
        h = o * jnp.tanh(c)
        hid_x[row:row + B_pad, :] = h             # aligned (8, 128) store

    # ---- Final Linear over one contiguous hidden slab.  Kept in f32 (tiny
    # matmul) to tighten logit accuracy; Vp is a multiple of 128 so the store
    # is lane-dense / unmasked.
    out_ref[...] = jnp.dot(hid_x[...], w_fc_ref[...],
                           preferred_element_type=jnp.float32) + b_fc_ref[...]


def language_model_forward(x, params):
    """x: (B, T) int token ids -> logits (B, T, vocab) float32."""
    B, T = x.shape
    emb, w_ih, w_hh, b, w_fc, b_fc = (
        params["emb"], params["w_ih"], params["w_hh"],
        params["b"], params["w_fc"], params["b_fc"])
    V, E = emb.shape
    H = w_hh.shape[0]

    LANE, SUB = 128, 8
    B_pad = ((B + SUB - 1) // SUB) * SUB          # sublane-pad the batch
    Vp = ((V + LANE - 1) // LANE) * LANE          # lane-pad vocab dim

    # Pre-scale the g-gate (third H-block) columns by 2 (exact in fp, exact in
    # bf16) so the kernel can use a single full-tile sigmoid per step:
    # tanh(x) = 2*sigmoid(2x) - 1.
    gscale = jnp.concatenate([jnp.ones((2 * H,), jnp.float32),
                              jnp.full((H,), 2.0, jnp.float32),
                              jnp.ones((H,), jnp.float32)])

    # Fold the embedding into the input projection: (V, 4H) per-token table
    # computed once in f32, stored bf16 (only consumed by a bf16 MXU matmul).
    # Bias stays a separate f32 input for precision.
    # TODO(synk): at large vocab, keep the gather + matmul split instead of
    # this folded table, and grid the kernel over token-row / vocab-column
    # blocks ("parallel" dimension_semantics, >=256-row LHS tiles) so it fits
    # v7x's 64 MiB VMEM and uses both TensorCores.
    xw = jnp.dot(emb.astype(jnp.float32),
                 (w_ih * gscale[None, :]).astype(jnp.float32)).astype(jnp.bfloat16)
    b_s = (b * gscale[None, :]).astype(jnp.float32)
    w_hh_s = (w_hh * gscale[None, :]).astype(jnp.bfloat16)

    w_fc_p = jnp.pad(w_fc, ((0, 0), (0, Vp - V))).astype(jnp.float32)
    b_fc_p = jnp.pad(b_fc, ((0, 0), (0, Vp - V))).astype(jnp.float32)

    # Time-major (T, B_pad) ids, pad rows = -1 (=> all-zero one-hot rows).
    ids_tb = jnp.transpose(x).astype(jnp.int32)                       # (T, B)
    ids_pad = jnp.pad(ids_tb, ((0, 0), (0, B_pad - B)), constant_values=-1)
    ids_col = ids_pad.reshape(T * B_pad, 1)                           # (T*B_pad, 1)

    kernel = functools.partial(_lm_kernel, T=T, B_pad=B_pad, H=H)
    vmem = pl.BlockSpec(memory_space=pltpu.MemorySpace.VMEM)

    out_flat = pl.pallas_call(
        kernel,
        out_shape=jax.ShapeDtypeStruct((T * B_pad, Vp), jnp.float32),
        in_specs=[vmem] * 6,
        out_specs=vmem,
        scratch_shapes=[
            pltpu.VMEM((T * B_pad, 4 * H), jnp.float32),   # x @ W_ih + b
            pltpu.VMEM((T * B_pad, H), jnp.float32),       # hidden states
        ],
    )(ids_col, xw, b_s, w_hh_s, w_fc_p, b_fc_p)

    # TODO(synk): once the kernel is gridded for realistic sizes, emit
    # batch-first logits directly from a per-(b, t) out BlockSpec instead of
    # this wrapper reshape/transpose (noise at toy size).
    out = out_flat.reshape(T, B_pad, Vp)[:, :B, :V]
    return jnp.transpose(out, (1, 0, 2))          # (B, T, V) batch_first


def reference_forward(x, params):
    """Pure-JAX f32 reference matching nn.Embedding -> nn.LSTM -> nn.Linear."""
    emb, w_ih, w_hh, b, w_fc, b_fc = (
        params["emb"], params["w_ih"], params["w_hh"],
        params["b"], params["w_fc"], params["b_fc"])
    B, T = x.shape
    H = w_hh.shape[0]
    e = emb[x]                                    # (B, T, E)
    h = jnp.zeros((B, H), jnp.float32)
    c = jnp.zeros((B, H), jnp.float32)
    outs = []
    for t in range(T):
        gates = e[:, t, :] @ w_ih + b + h @ w_hh
        i = jax.nn.sigmoid(gates[:, :H])
        f = jax.nn.sigmoid(gates[:, H:2 * H])
        g = jnp.tanh(gates[:, 2 * H:3 * H])
        o = jax.nn.sigmoid(gates[:, 3 * H:])
        c = f * c + i * g
        h = o * jnp.tanh(c)
        outs.append(h)
    hidden = jnp.stack(outs, axis=1)              # (B, T, H)
    return hidden @ w_fc + b_fc


if __name__ == "__main__":
    VOCAB, E, H = 32, 64, 128     # module defaults: embedding_dim=64, hidden_dim=128
    B, T = 2, 8

    key = jax.random.PRNGKey(0)
    k_emb, k_ih, k_hh, k_b, k_fc, k_bfc, k_x = jax.random.split(key, 7)

    params = {
        "emb":  0.1 * jax.random.normal(k_emb, (VOCAB, E), jnp.float32),
        "w_ih": 0.1 * jax.random.normal(k_ih, (E, 4 * H), jnp.float32),
        "w_hh": 0.1 * jax.random.normal(k_hh, (H, 4 * H), jnp.float32),
        # combined bias = b_ih + b_hh (PyTorch keeps them separate; sum is equivalent)
        "b":    0.1 * jax.random.normal(k_b, (1, 4 * H), jnp.float32),
        "w_fc": 0.1 * jax.random.normal(k_fc, (H, VOCAB), jnp.float32),
        "b_fc": 0.1 * jax.random.normal(k_bfc, (1, VOCAB), jnp.float32),
    }

    x = jax.random.randint(k_x, (B, T), 0, VOCAB, dtype=jnp.int32)

    out = language_model_forward(x, params)
    out = jax.block_until_ready(out)

    ref = reference_forward(x, params)
    assert out.shape == (B, T, VOCAB), out.shape
    # bf16 MXU matmuls (embedding/input-projection table and the recurrence
    # weights, both with f32 accumulation) introduce small drift vs. the f32
    # reference; tolerance relaxed accordingly.
    max_err = float(jnp.max(jnp.abs(out - ref)))
    assert jnp.allclose(out, ref, atol=2e-2, rtol=2e-2), \
        f"mismatch vs reference (max abs err {max_err})"

    print("KERNEL_OK")
</pallas_src>

<mosaic_0001>
module attributes {stable_mosaic.version = 11 : i64} {
  func.func @_lm_kernel(%arg0: memref<64x1xi32, #tpu.memory_space<vmem>>, %arg1: memref<32x512xbf16, #tpu.memory_space<vmem>>, %arg2: memref<1x512xf32, #tpu.memory_space<vmem>>, %arg3: memref<128x512xbf16, #tpu.memory_space<vmem>>, %arg4: memref<128x128xf32, #tpu.memory_space<vmem>>, %arg5: memref<1x128xf32, #tpu.memory_space<vmem>>, %arg6: memref<64x128xf32, #tpu.memory_space<vmem>>, %arg7: memref<64x512xf32, #tpu.memory_space<vmem>>, %arg8: memref<64x128xf32, #tpu.memory_space<vmem>>) attributes {dimension_semantics = [], scalar_prefetch = 0 : i64, scratch_operands = 2 : i64, tpu.core_type = #tpu.core_type<tc>} {
    %0 = tpu.iota {dimensions = array<i32: 1>} : vector<64x32xi32>
    %c0 = arith.constant 0 : index
    %c0_0 = arith.constant 0 : index
    %1 = vector.load %arg0[%c0, %c0_0] : memref<64x1xi32, #tpu.memory_space<vmem>>, vector<64x1xi32>
    %2 = vector.broadcast %1 : vector<64x1xi32> to vector<64x32xi32>
    %3 = arith.cmpi eq, %0, %2 : vector<64x32xi32>
    %cst = arith.constant 1.000000e+00 : f32
    %cst_1 = arith.constant 0.000000e+00 : f32
    %4 = vector.broadcast %cst : f32 to vector<64x32xf32>
    %5 = vector.broadcast %cst_1 : f32 to vector<64x32xf32>
    %6 = arith.select %3, %4, %5 : vector<64x32xi1>, vector<64x32xf32>
    %7 = arith.truncf %6 : vector<64x32xf32> to vector<64x32xbf16>
    %c0_2 = arith.constant 0 : index
    %c0_3 = arith.constant 0 : index
    %8 = vector.load %arg1[%c0_2, %c0_3] : memref<32x512xbf16, #tpu.memory_space<vmem>>, vector<32x512xbf16>
    %cst_4 = arith.constant dense<0.000000e+00> : vector<64x512xf32>
    %9 = tpu.matmul %7, %8, %cst_4 {dimension_numbers = #tpu.dot_dimension_numbers<[1], [0], [0], [1], [0, 0, 1, 1], [], []>} : vector<64x32xbf16>, vector<32x512xbf16>, vector<64x512xf32> -> vector<64x512xf32>
    %c0_5 = arith.constant 0 : index
    %c0_6 = arith.constant 0 : index
    %10 = vector.load %arg2[%c0_5, %c0_6] : memref<1x512xf32, #tpu.memory_space<vmem>>, vector<1x512xf32>
    %11 = vector.broadcast %10 : vector<1x512xf32> to vector<64x512xf32>
    %12 = arith.addf %9, %11 : vector<64x512xf32>
    %c0_7 = arith.constant 0 : index
    %c0_8 = arith.constant 0 : index
    %13 = vector.load %arg7[%c0_7, %c0_8] : memref<64x512xf32, #tpu.memory_space<vmem>>, vector<64x512xf32>
    tpu.vector_store %arg7[%c0_7, %c0_8], %12 {strides = array<i32>} : memref<64x512xf32, #tpu.memory_space<vmem>>, vector<64x512xf32>,
    %c0_9 = arith.constant 0 : index
    %c0_10 = arith.constant 0 : index
    %14 = vector.load %arg3[%c0_9, %c0_10] : memref<128x512xbf16, #tpu.memory_space<vmem>>, vector<128x512xbf16>
    %cst_11 = arith.constant 0.000000e+00 : f32
    %15 = vector.broadcast %cst_11 : f32 to vector<8x128xf32>
    %cst_12 = arith.constant 0.000000e+00 : f32
    %16 = vector.broadcast %cst_12 : f32 to vector<8x128xf32>
    %c0_13 = arith.constant 0 : index
    %c0_14 = arith.constant 0 : index
    %17 = vector.load %arg7[%c0_13, %c0_14] : memref<64x512xf32, #tpu.memory_space<vmem>>, vector<8x512xf32>
    %18 = arith.truncf %15 : vector<8x128xf32> to vector<8x128xbf16>
    %cst_15 = arith.constant dense<0.000000e+00> : vector<8x512xf32>
    %19 = tpu.matmul %18, %14, %cst_15 {dimension_numbers = #tpu.dot_dimension_numbers<[1], [0], [0], [1], [0, 0, 1, 1], [], []>} : vector<8x128xbf16>, vector<128x512xbf16>, vector<8x512xf32> -> vector<8x512xf32>
    %20 = arith.addf %17, %19 : vector<8x512xf32>
    %21 = arith.negf %20 : vector<8x512xf32>
    %22 = math.exp %21 : vector<8x512xf32>
    %cst_16 = arith.constant 1.000000e+00 : f32
    %23 = vector.broadcast %cst_16 : f32 to vector<8x512xf32>
    %24 = arith.addf %23, %22 : vector<8x512xf32>
    %25 = arith.divf %23, %24 : vector<8x512xf32>
    %26 = vector.extract_strided_slice %25 {offsets = [0, 0], sizes = [8, 128], strides = [1, 1]} : vector<8x512xf32> to vector<8x128xf32>
    %27 = vector.extract_strided_slice %25 {offsets = [0, 128], sizes = [8, 128], strides = [1, 1]} : vector<8x512xf32> to vector<8x128xf32>
    %28 = vector.extract_strided_slice %25 {offsets = [0, 256], sizes = [8, 128], strides = [1, 1]} : vector<8x512xf32> to vector<8x128xf32>
    %cst_17 = arith.constant 2.000000e+00 : f32
    %29 = vector.broadcast %cst_17 : f32 to vector<8x128xf32>
    %30 = arith.mulf %29, %28 : vector<8x128xf32>
    %cst_18 = arith.constant 1.000000e+00 : f32
    %31 = vector.broadcast %cst_18 : f32 to vector<8x128xf32>
    %32 = arith.subf %30, %31 : vector<8x128xf32>
    %33 = vector.extract_strided_slice %25 {offsets = [0, 384], sizes = [8, 128], strides = [1, 1]} : vector<8x512xf32> to vector<8x128xf32>
    %34 = arith.mulf %27, %16 : vector<8x128xf32>
    %35 = arith.mulf %26, %32 : vector<8x128xf32>
    %36 = arith.addf %34, %35 : vector<8x128xf32>
    %37 = math.tanh %36 : vector<8x128xf32>
    %38 = arith.mulf %33, %37 : vector<8x128xf32>
    %c0_19 = arith.constant 0 : index
    %c0_20 = arith.constant 0 : index
    %39 = vector.load %arg8[%c0_19, %c0_20] : memref<64x128xf32, #tpu.memory_space<vmem>>, vector<8x128xf32>
    tpu.vector_store %arg8[%c0_19, %c0_20], %38 {strides = array<i32>} : memref<64x128xf32, #tpu.memory_space<vmem>>, vector<8x128xf32>,
    %c8 = arith.constant 8 : index
    %c0_21 = arith.constant 0 : index
    %40 = vector.load %arg7[%c8, %c0_21] : memref<64x512xf32, #tpu.memory_space<vmem>>, vector<8x512xf32>
    %41 = arith.truncf %38 : vector<8x128xf32> to vector<8x128xbf16>
    %cst_22 = arith.constant dense<0.000000e+00> : vector<8x512xf32>
    %42 = tpu.matmul %41, %14, %cst_22 {dimension_numbers = #tpu.dot_dimension_numbers<[1], [0], [0], [1], [0, 0, 1, 1], [], []>} : vector<8x128xbf16>, vector<128x512xbf16>, vector<8x512xf32> -> vector<8x512xf32>
    %43 = arith.addf %40, %42 : vector<8x512xf32>
    %44 = arith.negf %43 : vector<8x512xf32>
    %45 = math.exp %44 : vector<8x512xf32>
    %cst_23 = arith.constant 1.000000e+00 : f32
    %46 = vector.broadcast %cst_23 : f32 to vector<8x512xf32>
    %47 = arith.addf %46, %45 : vector<8x512xf32>
    %48 = arith.divf %46, %47 : vector<8x512xf32>
    %49 = vector.extract_strided_slice %48 {offsets = [0, 0], sizes = [8, 128], strides = [1, 1]} : vector<8x512xf32> to vector<8x128xf32>
    %50 = vector.extract_strided_slice %48 {offsets = [0, 128], sizes = [8, 128], strides = [1, 1]} : vector<8x512xf32> to vector<8x128xf32>
    %51 = vector.extract_strided_slice %48 {offsets = [0, 256], sizes = [8, 128], strides = [1, 1]} : vector<8x512xf32> to vector<8x128xf32>
    %cst_24 = arith.constant 2.000000e+00 : f32
    %52 = vector.broadcast %cst_24 : f32 to vector<8x128xf32>
    %53 = arith.mulf %52, %51 : vector<8x128xf32>
    %cst_25 = arith.constant 1.000000e+00 : f32
    %54 = vector.broadcast %cst_25 : f32 to vector<8x128xf32>
    %55 = arith.subf %53, %54 : vector<8x128xf32>
    %56 = vector.extract_strided_slice %48 {offsets = [0, 384], sizes = [8, 128], strides = [1, 1]} : vector<8x512xf32> to vector<8x128xf32>
    %57 = arith.mulf %50, %36 : vector<8x128xf32>
    %58 = arith.mulf %49, %55 : vector<8x128xf32>
    %59 = arith.addf %57, %58 : vector<8x128xf32>
    %60 = math.tanh %59 : vector<8x128xf32>
    %61 = arith.mulf %56, %60 : vector<8x128xf32>
    %c8_26 = arith.constant 8 : index
    %c0_27 = arith.constant 0 : index
    %62 = vector.load %arg8[%c8_26, %c0_27] : memref<64x128xf32, #tpu.memory_space<vmem>>, vector<8x128xf32>
    tpu.vector_store %arg8[%c8_26, %c0_27], %61 {strides = array<i32>} : memref<64x128xf32, #tpu.memory_space<vmem>>, vector<8x128xf32>,
    %c16 = arith.constant 16 : index
    %c0_28 = arith.constant 0 : index
    %63 = vector.load %arg7[%c16, %c0_28] : memref<64x512xf32, #tpu.memory_space<vmem>>, vector<8x512xf32>
    %64 = arith.truncf %61 : vector<8x128xf32> to vector<8x128xbf16>
    %cst_29 = arith.constant dense<0.000000e+00> : vector<8x512xf32>
    %65 = tpu.matmul %64, %14, %cst_29 {dimension_numbers = #tpu.dot_dimension_numbers<[1], [0], [0], [1], [0, 0, 1, 1], [], []>} : vector<8x128xbf16>, vector<128x512xbf16>, vector<8x512xf32> -> vector<8x512xf32>
    %66 = arith.addf %63, %65 : vector<8x512xf32>
    %67 = arith.negf %66 : vector<8x512xf32>
    %68 = math.exp %67 : vector<8x512xf32>
    %cst_30 = arith.constant 1.000000e+00 : f32
    %69 = vector.broadcast %cst_30 : f32 to vector<8x512xf32>
    %70 = arith.addf %69, %68 : vector<8x512xf32>
    %71 = arith.divf %69, %70 : vector<8x512xf32>
    %72 = vector.extract_strided_slice %71 {offsets = [0, 0], sizes = [8, 128], strides = [1, 1]} : vector<8x512xf32> to vector<8x128xf32>
    %73 = vector.extract_strided_slice %71 {offsets = [0, 128], sizes = [8, 128], strides = [1, 1]} : vector<8x512xf32> to vector<8x128xf32>
    %74 = vector.extract_strided_slice %71 {offsets = [0, 256], sizes = [8, 128], strides = [1, 1]} : vector<8x512xf32> to vector<8x128xf32>
    %cst_31 = arith.constant 2.000000e+00 : f32
    %75 = vector.broadcast %cst_31 : f32 to vector<8x128xf32>
    %76 = arith.mulf %75, %74 : vector<8x128xf32>
    %cst_32 = arith.constant 1.000000e+00 : f32
    %77 = vector.broadcast %cst_32 : f32 to vector<8x128xf32>
    %78 = arith.subf %76, %77 : vector<8x128xf32>
    %79 = vector.extract_strided_slice %71 {offsets = [0, 384], sizes = [8, 128], strides = [1, 1]} : vector<8x512xf32> to vector<8x128xf32>
    %80 = arith.mulf %73, %59 : vector<8x128xf32>
    %81 = arith.mulf %72, %78 : vector<8x128xf32>
    %82 = arith.addf %80, %81 : vector<8x128xf32>
    %83 = math.tanh %82 : vector<8x128xf32>
    %84 = arith.mulf %79, %83 : vector<8x128xf32>
    %c16_33 = arith.constant 16 : index
    %c0_34 = arith.constant 0 : index
    %85 = vector.load %arg8[%c16_33, %c0_34] : memref<64x128xf32, #tpu.memory_space<vmem>>, vector<8x128xf32>
    tpu.vector_store %arg8[%c16_33, %c0_34], %84 {strides = array<i32>} : memref<64x128xf32, #tpu.memory_space<vmem>>, vector<8x128xf32>,
    %c24 = arith.constant 24 : index
    %c0_35 = arith.constant 0 : index
    %86 = vector.load %arg7[%c24, %c0_35] : memref<64x512xf32, #tpu.memory_space<vmem>>, vector<8x512xf32>
    %87 = arith.truncf %84 : vector<8x128xf32> to vector<8x128xbf16>
    %cst_36 = arith.constant dense<0.000000e+00> : vector<8x512xf32>
    %88 = tpu.matmul %87, %14, %cst_36 {dimension_numbers = #tpu.dot_dimension_numbers<[1], [0], [0], [1], [0, 0, 1, 1], [], []>} : vector<8x128xbf16>, vector<128x512xbf16>, vector<8x512xf32> -> vector<8x512xf32>
    %89 = arith.addf %86, %88 : vector<8x512xf32>
    %90 = arith.negf %89 : vector<8x512xf32>
    %91 = math.exp %90 : vector<8x512xf32>
    %cst_37 = arith.constant 1.000000e+00 : f32
    %92 = vector.broadcast %cst_37 : f32 to vector<8x512xf32>
    %93 = arith.addf %92, %91 : vector<8x512xf32>
    %94 = arith.divf %92, %93 : vector<8x512xf32>
    %95 = vector.extract_strided_slice %94 {offsets = [0, 0], sizes = [8, 128], strides = [1, 1]} : vector<8x512xf32> to vector<8x128xf32>
    %96 = vector.extract_strided_slice %94 {offsets = [0, 128], sizes = [8, 128], strides = [1, 1]} : vector<8x512xf32> to vector<8x128xf32>
    %97 = vector.extract_strided_slice %94 {offsets = [0, 256], sizes = [8, 128], strides = [1, 1]} : vector<8x512xf32> to vector<8x128xf32>
    %cst_38 = arith.constant 2.000000e+00 : f32
    %98 = vector.broadcast %cst_38 : f32 to vector<8x128xf32>
    %99 = arith.mulf %98, %97 : vector<8x128xf32>
    %cst_39 = arith.constant 1.000000e+00 : f32
    %100 = vector.broadcast %cst_39 : f32 to vector<8x128xf32>
    %101 = arith.subf %99, %100 : vector<8x128xf32>
    %102 = vector.extract_strided_slice %94 {offsets = [0, 384], sizes = [8, 128], strides = [1, 1]} : vector<8x512xf32> to vector<8x128xf32>
    %103 = arith.mulf %96, %82 : vector<8x128xf32>
    %104 = arith.mulf %95, %101 : vector<8x128xf32>
    %105 = arith.addf %103, %104 : vector<8x128xf32>
    %106 = math.tanh %105 : vector<8x128xf32>
    %107 = arith.mulf %102, %106 : vector<8x128xf32>
    %c24_40 = arith.constant 24 : index
    %c0_41 = arith.constant 0 : index
    %108 = vector.load %arg8[%c24_40, %c0_41] : memref<64x128xf32, #tpu.memory_space<vmem>>, vector<8x128xf32>
    tpu.vector_store %arg8[%c24_40, %c0_41], %107 {strides = array<i32>} : memref<64x128xf32, #tpu.memory_space<vmem>>, vector<8x128xf32>,
    %c32 = arith.constant 32 : index
    %c0_42 = arith.constant 0 : index
    %109 = vector.load %arg7[%c32, %c0_42] : memref<64x512xf32, #tpu.memory_space<vmem>>, vector<8x512xf32>
    %110 = arith.truncf %107 : vector<8x128xf32> to vector<8x128xbf16>
    %cst_43 = arith.constant dense<0.000000e+00> : vector<8x512xf32>
    %111 = tpu.matmul %110, %14, %cst_43 {dimension_numbers = #tpu.dot_dimension_numbers<[1], [0], [0], [1], [0, 0, 1, 1], [], []>} : vector<8x128xbf16>, vector<128x512xbf16>, vector<8x512xf32> -> vector<8x512xf32>
    %112 = arith.addf %109, %111 : vector<8x512xf32>
    %113 = arith.negf %112 : vector<8x512xf32>
    %114 = math.exp %113 : vector<8x512xf32>
    %cst_44 = arith.constant 1.000000e+00 : f32
    %115 = vector.broadcast %cst_44 : f32 to vector<8x512xf32>
    %116 = arith.addf %115, %114 : vector<8x512xf32>
    %117 = arith.divf %115, %116 : vector<8x512xf32>
    %118 = vector.extract_strided_slice %117 {offsets = [0, 0], sizes = [8, 128], strides = [1, 1]} : vector<8x512xf32> to vector<8x128xf32>
    %119 = vector.extract_strided_slice %117 {offsets = [0, 128], sizes = [8, 128], strides = [1, 1]} : vector<8x512xf32> to vector<8x128xf32>
    %120 = vector.extract_strided_slice %117 {offsets = [0, 256], sizes = [8, 128], strides = [1, 1]} : vector<8x512xf32> to vector<8x128xf32>
    %cst_45 = arith.constant 2.000000e+00 : f32
    %121 = vector.broadcast %cst_45 : f32 to vector<8x128xf32>
    %122 = arith.mulf %121, %120 : vector<8x128xf32>
    %cst_46 = arith.constant 1.000000e+00 : f32
    %123 = vector.broadcast %cst_46 : f32 to vector<8x128xf32>
    %124 = arith.subf %122, %123 : vector<8x128xf32>
    %125 = vector.extract_strided_slice %117 {offsets = [0, 384], sizes = [8, 128], strides = [1, 1]} : vector<8x512xf32> to vector<8x128xf32>
    %126 = arith.mulf %119, %105 : vector<8x128xf32>
    %127 = arith.mulf %118, %124 : vector<8x128xf32>
    %128 = arith.addf %126, %127 : vector<8x128xf32>
    %129 = math.tanh %128 : vector<8x128xf32>
    %130 = arith.mulf %125, %129 : vector<8x128xf32>
    %c32_47 = arith.constant 32 : index
    %c0_48 = arith.constant 0 : index
    %131 = vector.load %arg8[%c32_47, %c0_48] : memref<64x128xf32, #tpu.memory_space<vmem>>, vector<8x128xf32>
    tpu.vector_store %arg8[%c32_47, %c0_48], %130 {strides = array<i32>} : memref<64x128xf32, #tpu.memory_space<vmem>>, vector<8x128xf32>,
    %c40 = arith.constant 40 : index
    %c0_49 = arith.constant 0 : index
    %132 = vector.load %arg7[%c40, %c0_49] : memref<64x512xf32, #tpu.memory_space<vmem>>, vector<8x512xf32>
    %133 = arith.truncf %130 : vector<8x128xf32> to vector<8x128xbf16>
    %cst_50 = arith.constant dense<0.000000e+00> : vector<8x512xf32>
    %134 = tpu.matmul %133, %14, %cst_50 {dimension_numbers = #tpu.dot_dimension_numbers<[1], [0], [0], [1], [0, 0, 1, 1], [], []>} : vector<8x128xbf16>, vector<128x512xbf16>, vector<8x512xf32> -> vector<8x512xf32>
    %135 = arith.addf %132, %134 : vector<8x512xf32>
    %136 = arith.negf %135 : vector<8x512xf32>
    %137 = math.exp %136 : vector<8x512xf32>
    %cst_51 = arith.constant 1.000000e+00 : f32
    %138 = vector.broadcast %cst_51 : f32 to vector<8x512xf32>
    %139 = arith.addf %138, %137 : vector<8x512xf32>
    %140 = arith.divf %138, %139 : vector<8x512xf32>
    %141 = vector.extract_strided_slice %140 {offsets = [0, 0], sizes = [8, 128], strides = [1, 1]} : vector<8x512xf32> to vector<8x128xf32>
    %142 = vector.extract_strided_slice %140 {offsets = [0, 128], sizes = [8, 128], strides = [1, 1]} : vector<8x512xf32> to vector<8x128xf32>
    %143 = vector.extract_strided_slice %140 {offsets = [0, 256], sizes = [8, 128], strides = [1, 1]} : vector<8x512xf32> to vector<8x128xf32>
    %cst_52 = arith.constant 2.000000e+00 : f32
    %144 = vector.broadcast %cst_52 : f32 to vector<8x128xf32>
    %145 = arith.mulf %144, %143 : vector<8x128xf32>
    %cst_53 = arith.constant 1.000000e+00 : f32
    %146 = vector.broadcast %cst_53 : f32 to vector<8x128xf32>
    %147 = arith.subf %145, %146 : vector<8x128xf32>
    %148 = vector.extract_strided_slice %140 {offsets = [0, 384], sizes = [8, 128], strides = [1, 1]} : vector<8x512xf32> to vector<8x128xf32>
    %149 = arith.mulf %142, %128 : vector<8x128xf32>
    %150 = arith.mulf %141, %147 : vector<8x128xf32>
    %151 = arith.addf %149, %150 : vector<8x128xf32>
    %152 = math.tanh %151 : vector<8x128xf32>
    %153 = arith.mulf %148, %152 : vector<8x128xf32>
    %c40_54 = arith.constant 40 : index
    %c0_55 = arith.constant 0 : index
    %154 = vector.load %arg8[%c40_54, %c0_55] : memref<64x128xf32, #tpu.memory_space<vmem>>, vector<8x128xf32>
    tpu.vector_store %arg8[%c40_54, %c0_55], %153 {strides = array<i32>} : memref<64x128xf32, #tpu.memory_space<vmem>>, vector<8x128xf32>,
    %c48 = arith.constant 48 : index
    %c0_56 = arith.constant 0 : index
    %155 = vector.load %arg7[%c48, %c0_56] : memref<64x512xf32, #tpu.memory_space<vmem>>, vector<8x512xf32>
    %156 = arith.truncf %153 : vector<8x128xf32> to vector<8x128xbf16>
    %cst_57 = arith.constant dense<0.000000e+00> : vector<8x512xf32>
    %157 = tpu.matmul %156, %14, %cst_57 {dimension_numbers = #tpu.dot_dimension_numbers<[1], [0], [0], [1], [0, 0, 1, 1], [], []>} : vector<8x128xbf16>, vector<128x512xbf16>, vector<8x512xf32> -> vector<8x512xf32>
    %158 = arith.addf %155, %157 : vector<8x512xf32>
    %159 = arith.negf %158 : vector<8x512xf32>
    %160 = math.exp %159 : vector<8x512xf32>
    %cst_58 = arith.constant 1.000000e+00 : f32
    %161 = vector.broadcast %cst_58 : f32 to vector<8x512xf32>
    %162 = arith.addf %161, %160 : vector<8x512xf32>
    %163 = arith.divf %161, %162 : vector<8x512xf32>
    %164 = vector.extract_strided_slice %163 {offsets = [0, 0], sizes = [8, 128], strides = [1, 1]} : vector<8x512xf32> to vector<8x128xf32>
    %165 = vector.extract_strided_slice %163 {offsets = [0, 128], sizes = [8, 128], strides = [1, 1]} : vector<8x512xf32> to vector<8x128xf32>
    %166 = vector.extract_strided_slice %163 {offsets = [0, 256], sizes = [8, 128], strides = [1, 1]} : vector<8x512xf32> to vector<8x128xf32>
    %cst_59 = arith.constant 2.000000e+00 : f32
    %167 = vector.broadcast %cst_59 : f32 to vector<8x128xf32>
    %168 = arith.mulf %167, %166 : vector<8x128xf32>
    %cst_60 = arith.constant 1.000000e+00 : f32
    %169 = vector.broadcast %cst_60 : f32 to vector<8x128xf32>
    %170 = arith.subf %168, %169 : vector<8x128xf32>
    %171 = vector.extract_strided_slice %163 {offsets = [0, 384], sizes = [8, 128], strides = [1, 1]} : vector<8x512xf32> to vector<8x128xf32>
    %172 = arith.mulf %165, %151 : vector<8x128xf32>
    %173 = arith.mulf %164, %170 : vector<8x128xf32>
    %174 = arith.addf %172, %173 : vector<8x128xf32>
    %175 = math.tanh %174 : vector<8x128xf32>
    %176 = arith.mulf %171, %175 : vector<8x128xf32>
    %c48_61 = arith.constant 48 : index
    %c0_62 = arith.constant 0 : index
    %177 = vector.load %arg8[%c48_61, %c0_62] : memref<64x128xf32, #tpu.memory_space<vmem>>, vector<8x128xf32>
    tpu.vector_store %arg8[%c48_61, %c0_62], %176 {strides = array<i32>} : memref<64x128xf32, #tpu.memory_space<vmem>>, vector<8x128xf32>,
    %c56 = arith.constant 56 : index
    %c0_63 = arith.constant 0 : index
    %178 = vector.load %arg7[%c56, %c0_63] : memref<64x512xf32, #tpu.memory_space<vmem>>, vector<8x512xf32>
    %179 = arith.truncf %176 : vector<8x128xf32> to vector<8x128xbf16>
    %cst_64 = arith.constant dense<0.000000e+00> : vector<8x512xf32>
    %180 = tpu.matmul %179, %14, %cst_64 {dimension_numbers = #tpu.dot_dimension_numbers<[1], [0], [0], [1], [0, 0, 1, 1], [], []>} : vector<8x128xbf16>, vector<128x512xbf16>, vector<8x512xf32> -> vector<8x512xf32>
    %181 = arith.addf %178, %180 : vector<8x512xf32>
    %182 = arith.negf %181 : vector<8x512xf32>
    %183 = math.exp %182 : vector<8x512xf32>
    %cst_65 = arith.constant 1.000000e+00 : f32
    %184 = vector.broadcast %cst_65 : f32 to vector<8x512xf32>
    %185 = arith.addf %184, %183 : vector<8x512xf32>
    %186 = arith.divf %184, %185 : vector<8x512xf32>
    %187 = vector.extract_strided_slice %186 {offsets = [0, 0], sizes = [8, 128], strides = [1, 1]} : vector<8x512xf32> to vector<8x128xf32>
    %188 = vector.extract_strided_slice %186 {offsets = [0, 128], sizes = [8, 128], strides = [1, 1]} : vector<8x512xf32> to vector<8x128xf32>
    %189 = vector.extract_strided_slice %186 {offsets = [0, 256], sizes = [8, 128], strides = [1, 1]} : vector<8x512xf32> to vector<8x128xf32>
    %cst_66 = arith.constant 2.000000e+00 : f32
    %190 = vector.broadcast %cst_66 : f32 to vector<8x128xf32>
    %191 = arith.mulf %190, %189 : vector<8x128xf32>
    %cst_67 = arith.constant 1.000000e+00 : f32
    %192 = vector.broadcast %cst_67 : f32 to vector<8x128xf32>
    %193 = arith.subf %191, %192 : vector<8x128xf32>
    %194 = vector.extract_strided_slice %186 {offsets = [0, 384], sizes = [8, 128], strides = [1, 1]} : vector<8x512xf32> to vector<8x128xf32>
    %195 = arith.mulf %188, %174 : vector<8x128xf32>
    %196 = arith.mulf %187, %193 : vector<8x128xf32>
    %197 = arith.addf %195, %196 : vector<8x128xf32>
    %198 = math.tanh %197 : vector<8x128xf32>
    %199 = arith.mulf %194, %198 : vector<8x128xf32>
    %c56_68 = arith.constant 56 : index
    %c0_69 = arith.constant 0 : index
    %200 = vector.load %arg8[%c56_68, %c0_69] : memref<64x128xf32, #tpu.memory_space<vmem>>, vector<8x128xf32>
    tpu.vector_store %arg8[%c56_68, %c0_69], %199 {strides = array<i32>} : memref<64x128xf32, #tpu.memory_space<vmem>>, vector<8x128xf32>,
    %c0_70 = arith.constant 0 : index
    %c0_71 = arith.constant 0 : index
    %201 = vector.load %arg8[%c0_70, %c0_71] : memref<64x128xf32, #tpu.memory_space<vmem>>, vector<64x128xf32>
    %c0_72 = arith.constant 0 : index
    %c0_73 = arith.constant 0 : index
    %202 = vector.load %arg4[%c0_72, %c0_73] : memref<128x128xf32, #tpu.memory_space<vmem>>, vector<128x128xf32>
    %cst_74 = arith.constant dense<0.000000e+00> : vector<64x128xf32>
    %203 = tpu.matmul %201, %202, %cst_74 {dimension_numbers = #tpu.dot_dimension_numbers<[1], [0], [0], [1], [0, 0, 1, 1], [], []>} : vector<64x128xf32>, vector<128x128xf32>, vector<64x128xf32> -> vector<64x128xf32>
    %c0_75 = arith.constant 0 : index
    %c0_76 = arith.constant 0 : index
    %204 = vector.load %arg5[%c0_75, %c0_76] : memref<1x128xf32, #tpu.memory_space<vmem>>, vector<1x128xf32>
    %205 = vector.broadcast %204 : vector<1x128xf32> to vector<64x128xf32>
    %206 = arith.addf %203, %205 : vector<64x128xf32>
    %c0_77 = arith.constant 0 : index
    %c0_78 = arith.constant 0 : index
    %207 = vector.load %arg6[%c0_77, %c0_78] : memref<64x128xf32, #tpu.memory_space<vmem>>, vector<64x128xf32>
    tpu.vector_store %arg6[%c0_77, %c0_78], %206 {strides = array<i32>} : memref<64x128xf32, #tpu.memory_space<vmem>>, vector<64x128xf32>,
    return
  }
}

</mosaic_0001>

<llo_original>
// kernel: tpu_custom_call.1
$region0: #{tpu_custom_call.1}
  #allocation0 [shape = 'u32[]', space=smem, size = 0x4, offset = 0x4, fixed_abs, tag = 'smem constant byte address 0x4 - core index']
  #allocation1 [shape = 'u32[144,128]{1,0:T(1,128)}', space=vmem, size = 0x12000, scoped, tag = 'internal scratch']
  #allocation2 [shape = 'f32[64,512]{1,0:T(8,128)}', space=vmem, size = 0x20000, scoped, tag = 'scratch operand']
  #allocation3 [shape = 'f32[64,128]{1,0:T(8,128)}', space=vmem, size = 0x8000, scoped, tag = 'scratch operand']
  %s0 = inlined_call_operand.vmem [shape: s32[64,1], index: 0, kind: input, shape index: {}]
  %s1 = inlined_call_operand.vmem [shape: bf16[32,512], index: 1, kind: input, shape index: {}]
  %s2 = inlined_call_operand.vmem [shape: f32[1,512], index: 2, kind: input, shape index: {}]
  %s3 = inlined_call_operand.hbm [shape: bf16[128,512], index: 3, kind: input, shape index: {}]
  %s4 = inlined_call_operand.hbm [shape: f32[128,128], index: 4, kind: input, shape index: {}]
  %s5 = inlined_call_operand.vmem [shape: f32[1,128], index: 5, kind: input, shape index: {}]
  %s6 = inlined_call_operand.hbm [shape: f32[64,128], index: 6, kind: output, shape index: {}]
  %s7 = sld [smem:[#allocation0]]
  $region42: #{tpu_custom_call.1} parent=0
    _
  %s9 = ssub.s32 1, %s7
  %s10 = scalar_select 0, %s9, %s7
  $region1: #{tpu_custom_call.1} parent=0
    #allocation4 [shape = 'u8[131072]{0}', space=vmem, size = 0x20000, scoped, tag = 'input window, operand 3, single buffered']
    #allocation5 [shape = 's32[1]{0}', space=sflag, size = 0x4, scoped, tag = 'scoped memory for tpu_custom_call.1']
    #allocation6 [shape = 's32[1]{0}', space=sflag, size = 0x4, scoped, tag = 'scoped memory for tpu_custom_call.1']
    #allocation7 [shape = 'u8[65536]{0}', space=vmem, size = 0x10000, scoped, tag = 'input window, operand 4, single buffered']
    #allocation8 [shape = 's32[1]{0}', space=sflag, size = 0x4, scoped, tag = 'scoped memory for tpu_custom_call.1']
    #allocation9 [shape = 'u8[32768]{0}', space=vmem, size = 0x8000, scoped, tag = 'output window, operand 0, single buffered']
    %11 = vsyncpa [#allocation5], 0
    %12 = vsyncpa [#allocation8], 0
    %13 = vsyncpa [#allocation6], 0
    // Predicated region
    $region2: #{tpu_custom_call.1} parent=1 // pred_check
      _
    $region3: #{tpu_custom_call.1} parent=1 // pred_check_branch
      %15 = sbr.rel (0) target = $region5
    $region4: #{tpu_custom_call.1} parent=1 // pred_region
      _
    $region5: #{tpu_custom_call.1} parent=1 // pred_fallthru
      _
    // Predicated region
    $region6: #{tpu_custom_call.1} parent=1 // pred_check
      _
    $region7: #{tpu_custom_call.1} parent=1 // pred_check_branch
      %17 = sbr.rel (0) target = $region9
    $region8: #{tpu_custom_call.1} parent=1 // pred_region
      _
    $region9: #{tpu_custom_call.1} parent=1 // pred_fallthru
      _
    // Predicated region
    $region10: #{tpu_custom_call.1} parent=1 // pred_check
      _
    $region11: #{tpu_custom_call.1} parent=1 // pred_check_branch
      %19 = sbr.rel (0) target = $region13
    $region12: #{tpu_custom_call.1} parent=1 // pred_region
      _
    $region13: #{tpu_custom_call.1} parent=1 // pred_fallthru
      _
    // Predicated region
    $region14: #{tpu_custom_call.1} parent=1 // pred_check
      _
    $region15: #{tpu_custom_call.1} parent=1 // pred_check_branch
      %21 = sbr.rel (0) target = $region17
    $region16: #{tpu_custom_call.1} parent=1 // pred_region
      %s23 = ssub.s32 4096, 4096
      %24 = vsyncadd [#allocation5], %s23
      %s25 = sshll.u32 [#allocation4], 4
      %s26 = int_to_ptr.vmem [resolvable:$true] %s25
      %31 = dma.hbm_to_vmem [thread:$0]  %s3, 4096, %s26, [#allocation5], 256, 256, 16
    $region17: #{tpu_custom_call.1} parent=1 // pred_fallthru
      _
    // Predicated region
    $region18: #{tpu_custom_call.1} parent=1 // pred_check
      _
    $region19: #{tpu_custom_call.1} parent=1 // pred_check_branch
      %33 = sbr.rel (0) target = $region21
    $region20: #{tpu_custom_call.1} parent=1 // pred_region
      %s35 = ssub.s32 2048, 2048
      %36 = vsyncadd [#allocation8], %s35
      %s37 = sshll.u32 [#allocation7], 4
      %s38 = int_to_ptr.vmem [resolvable:$true] %s37
      %43 = dma.hbm_to_vmem [thread:$0]  %s4, 2048, %s38, [#allocation8], 128, 128, 8
    $region21: #{tpu_custom_call.1} parent=1 // pred_fallthru
      _
    // Predicated region
    $region22: #{tpu_custom_call.1} parent=1 // pred_check
      _
    $region23: #{tpu_custom_call.1} parent=1 // pred_check_branch
      %45 = sbr.rel (0) target = $region25
    $region24: #{tpu_custom_call.1} parent=1 // pred_region
      _
    $region25: #{tpu_custom_call.1} parent=1 // pred_fallthru
      _
    // Predicated region
    $region26: #{tpu_custom_call.1} parent=1 // pred_check
      _
    $region27: #{tpu_custom_call.1} parent=1 // pred_check_branch
      %47 = sbr.rel (0) target = $region29
    $region28: #{tpu_custom_call.1} parent=1 // pred_region
      %48 = dma.done [#allocation5], 4096
    $region29: #{tpu_custom_call.1} parent=1 // pred_fallthru
      _
    // Predicated region
    $region30: #{tpu_custom_call.1} parent=1 // pred_check
      _
    $region31: #{tpu_custom_call.1} parent=1 // pred_check_branch
      %50 = sbr.rel (0) target = $region33
    $region32: #{tpu_custom_call.1} parent=1 // pred_region
      %51 = dma.done [#allocation8], 2048
    $region33: #{tpu_custom_call.1} parent=1 // pred_fallthru
      _
    %v53 = vlaneseq
    %v54 = vand.u32 %v53, 127
    %v55 = vld [vmem:[%s0] sm:$0xff]
    %v56 = vld [vmem:[%s0 + $0x8] sm:$0xff]
    %v57 = vld [vmem:[%s0 + $0x10] sm:$0xff]
    %v58 = vld [vmem:[%s0 + $0x18] sm:$0xff]
    %v59 = vld [vmem:[%s0 + $0x20] sm:$0xff]
    %v60 = vld [vmem:[%s0 + $0x28] sm:$0xff]
    %v61 = vld [vmem:[%s0 + $0x30] sm:$0xff]
    %v62 = vld [vmem:[%s0 + $0x38] sm:$0xff]
    %63 = vset.pattern.permute.xlu0 0
    %64 = vperm.xlu0 %63, %v55
    %v65 = vpop.permute.xlu0 %64
    %66 = vset.pattern.permute.xlu0 0
    %67 = vperm.xlu0 %66, %v56
    %v68 = vpop.permute.xlu0 %67
    %69 = vset.pattern.permute.xlu0 0
    %70 = vperm.xlu0 %69, %v57
    %v71 = vpop.permute.xlu0 %70
    %72 = vset.pattern.permute.xlu0 0
    %73 = vperm.xlu0 %72, %v58
    %v74 = vpop.permute.xlu0 %73
    %75 = vset.pattern.permute.xlu0 0
    %76 = vperm.xlu0 %75, %v59
    %v77 = vpop.permute.xlu0 %76
    %78 = vset.pattern.permute.xlu0 0
    %79 = vperm.xlu0 %78, %v60
    %v80 = vpop.permute.xlu0 %79
    %81 = vset.pattern.permute.xlu0 0
    %82 = vperm.xlu0 %81, %v61
    %v83 = vpop.permute.xlu0 %82
    %84 = vset.pattern.permute.xlu0 0
    %85 = vperm.xlu0 %84, %v62
    %v86 = vpop.permute.xlu0 %85
    %vm87 = vcmp.eq.s32.totalorder %v54, %v65
    %vm88 = vcmp.eq.s32.totalorder %v54, %v68
    %vm89 = vcmp.eq.s32.totalorder %v54, %v71
    %vm90 = vcmp.eq.s32.totalorder %v54, %v74
    %vm91 = vcmp.eq.s32.totalorder %v54, %v77
    %vm92 = vcmp.eq.s32.totalorder %v54, %v80
    %vm93 = vcmp.eq.s32.totalorder %v54, %v83
    %vm94 = vcmp.eq.s32.totalorder %v54, %v86
    %v95 = vsel %vm87, 1.0, 0.0
    %v96 = vsel %vm88, 1.0, 0.0
    %v97 = vsel %vm89, 1.0, 0.0
    %v98 = vsel %vm90, 1.0, 0.0
    %v99 = vsel %vm91, 1.0, 0.0
    %v100 = vsel %vm92, 1.0, 0.0
    %v101 = vsel %vm93, 1.0, 0.0
    %v102 = vsel %vm94, 1.0, 0.0
    %v103 = vpack.c.bf16 %v96, %v95
    %v104 = vpack.c.bf16 %v98, %v97
    %v105 = vpack.c.bf16 %v100, %v99
    %v106 = vpack.c.bf16 %v102, %v101
    %v107 = vld [vmem:[%s1] sm:$0xff]
    %v108 = vld [vmem:[%s1 + $0x8] sm:$0xff]
    %v109 = vld [vmem:[%s1 + $0x10] sm:$0xff]
    %v110 = vld [vmem:[%s1 + $0x18] sm:$0xff]
    %v111 = vld [vmem:[%s1 + $0x20] sm:$0xff]
    %v112 = vld [vmem:[%s1 + $0x28] sm:$0xff]
    %v113 = vld [vmem:[%s1 + $0x30] sm:$0xff]
    %v114 = vld [vmem:[%s1 + $0x38] sm:$0xff]
    %v115 = vld [vmem:[%s2] sm:$0xf]
    %v117 = vlaneseq
    %v118 = vshrl.u32 %v117, 7
    %v119 = vsub.s32 0, %v118
    %v120 = vrot.slane %v115, %v119
    %v121 = vlaneseq
    %v122 = vshrl.u32 %v121, 7
    %v123 = vsub.s32 1, %v122
    %v124 = vrot.slane %v115, %v123
    %v125 = vlaneseq
    %v126 = vshrl.u32 %v125, 7
    %v127 = vsub.s32 2, %v126
    %v128 = vrot.slane %v115, %v127
    %v129 = vlaneseq
    %v130 = vshrl.u32 %v129, 7
    %v131 = vsub.s32 3, %v130
    %v132 = vrot.slane %v115, %v131
    %v145 = vunpack.c.l.b16 %v107
    %v146 = vunpack.c.h.b16 %v107
    %v147 = vunpack.c.l.b16 %v108
    %v148 = vunpack.c.h.b16 %v108
    %v149 = vunpack.c.l.b16 %v109
    %v150 = vunpack.c.h.b16 %v109
    %v151 = vunpack.c.l.b16 %v110
    %v152 = vunpack.c.h.b16 %v110
    %v153 = vunpack.c.l.b16 %v111
    %v154 = vunpack.c.h.b16 %v111
    %v155 = vunpack.c.l.b16 %v112
    %v156 = vunpack.c.h.b16 %v112
    %v157 = vunpack.c.l.b16 %v113
    %v158 = vunpack.c.h.b16 %v113
    %v159 = vunpack.c.l.b16 %v114
    %v160 = vunpack.c.h.b16 %v114
    %v161 = vpack.c.b16 %v149, %v145
    %v162 = vpack.c.b16 %v150, %v146
    %v163 = vpack.c.b16 %v151, %v147
    %v164 = vpack.c.b16 %v152, %v148
    %v165 = vpack.c.b16 %v157, %v153
    %v166 = vpack.c.b16 %v158, %v154
    %v167 = vpack.c.b16 %v159, %v155
    %v168 = vpack.c.b16 %v160, %v156
    %vm177 = vcmask 261120
    %v179 = vsel %vm177, %v103, 0
    %v182 = vsel %vm177, %v104, 0
    %v185 = vsel %vm177, %v105, 0
    %v188 = vsel %vm177, %v106, 0
    %190 = vmatprep.subr.bf16.mxu0 %v162
    %191 = vmatpush1.bf16.msra.mxu0 %v161
    %192 = vmatprep.subr.bf16.mxu0 %v166
    %193 = vmatpush1.bf16.msra.mxu0 %v165
    %194 = vmatprep.subr.bf16.mxu0 0
    %195 = vmatpush1.bf16.msra.mxu0 0
    %196 = vmatprep.subr.bf16.mxu0 0
    %197 = vmatpush1.bf16.msra.mxu0 0
    %198 = vmatprep.subr.bf16.mxu0 0
    %199 = vmatpush1.bf16.msra.mxu0 0
    %200 = vmatprep.subr.bf16.mxu0 0
    %201 = vmatpush1.bf16.msra.mxu0 0
    %202 = vmatprep.subr.bf16.mxu0 0
    %203 = vmatpush1.bf16.msra.mxu0 0
    %204 = vmatprep.subr.bf16.mxu0 0
    %205 = vmatpush1.bf16.msra.mxu0 0
    %206 = vmatprep.subr.bf16.mxu0 0
    %207 = vmatpush1.bf16.msra.mxu0 0
    %208 = vmatprep.subr.bf16.mxu0 0
    %209 = vmatpush1.bf16.msra.mxu0 0
    %210 = vmatprep.subr.bf16.mxu0 0
    %211 = vmatpush1.bf16.msra.mxu0 0
    %212 = vmatprep.subr.bf16.mxu0 0
    %213 = vmatpush1.bf16.msra.mxu0 0
    %214 = vmatprep.subr.bf16.mxu0 0
    %215 = vmatpush1.bf16.msra.mxu0 0
    %216 = vmatprep.subr.bf16.mxu0 0
    %217 = vmatpush1.bf16.msra.mxu0 0
    %218 = vmatprep.subr.bf16.mxu0 0
    %219 = vmatpush1.bf16.msra.mxu0 0
    %220 = vmatprep.subr.bf16.mxu0 0
    %221 = vmatpush1.bf16.msra.mxu0 0
    %222 = vmatprep.mubr.bf16.mxu0 0
    %223 = vmatmul.mubr.bf16.gmra.mrb[0].mxu0 %v179
    %v224 = vpop.f32.mrb[0].mxu0
    %v225 = vadd.f32 %v120, %v224
    %v226 = vpop.f32.mrb[0].mxu0
    %v227 = vadd.f32 %v124, %v226
    %v228 = vpop.f32.mrb[0].mxu0
    %v229 = vadd.f32 %v120, %v228
    %v230 = vpop.f32.mrb[0].mxu0
    %v231 = vadd.f32 %v124, %v230
    %232 = vmatprep.mubr.bf16.mxu0 0
    %233 = vmatmul.mubr.bf16.gmra.mrb[0].mxu0 %v182
    %v234 = vpop.f32.mrb[0].mxu0
    %v235 = vadd.f32 %v120, %v234
    %v236 = vpop.f32.mrb[0].mxu0
    %v237 = vadd.f32 %v124, %v236
    %v238 = vpop.f32.mrb[0].mxu0
    %v239 = vadd.f32 %v120, %v238
    %v240 = vpop.f32.mrb[0].mxu0
    %v241 = vadd.f32 %v124, %v240
    %242 = vmatprep.mubr.bf16.mxu0 0
    %243 = vmatmul.mubr.bf16.gmra.mrb[0].mxu0 %v185
    %v244 = vpop.f32.mrb[0].mxu0
    %v245 = vadd.f32 %v120, %v244
    %v246 = vpop.f32.mrb[0].mxu0
    %v247 = vadd.f32 %v124, %v246
    %v248 = vpop.f32.mrb[0].mxu0
    %v249 = vadd.f32 %v120, %v248
    %v250 = vpop.f32.mrb[0].mxu0
    %v251 = vadd.f32 %v124, %v250
    %252 = vmatprep.mubr.bf16.mxu0 0
    %253 = vmatmul.mubr.bf16.gmra.mrb[0].mxu0 %v188
    %v254 = vpop.f32.mrb[0].mxu0
    %v255 = vadd.f32 %v120, %v254
    %v256 = vpop.f32.mrb[0].mxu0
    %v257 = vadd.f32 %v124, %v256
    %v258 = vpop.f32.mrb[0].mxu0
    %v259 = vadd.f32 %v120, %v258
    %v260 = vpop.f32.mrb[0].mxu0
    %v261 = vadd.f32 %v124, %v260
    %262 = vdwg.mxu0
    %263 = vmatprep.subr.bf16.mxu0 %v164
    %264 = vmatpush1.bf16.msra.mxu0 %v163
    %265 = vmatprep.subr.bf16.mxu0 %v168
    %266 = vmatpush1.bf16.msra.mxu0 %v167
    %267 = vmatprep.subr.bf16.mxu0 0
    %268 = vmatpush1.bf16.msra.mxu0 0
    %269 = vmatprep.subr.bf16.mxu0 0
    %270 = vmatpush1.bf16.msra.mxu0 0
    %271 = vmatprep.subr.bf16.mxu0 0
    %272 = vmatpush1.bf16.msra.mxu0 0
    %273 = vmatprep.subr.bf16.mxu0 0
    %274 = vmatpush1.bf16.msra.mxu0 0
    %275 = vmatprep.subr.bf16.mxu0 0
    %276 = vmatpush1.bf16.msra.mxu0 0
    %277 = vmatprep.subr.bf16.mxu0 0
    %278 = vmatpush1.bf16.msra.mxu0 0
    %279 = vmatprep.subr.bf16.mxu0 0
    %280 = vmatpush1.bf16.msra.mxu0 0
    %281 = vmatprep.subr.bf16.mxu0 0
    %282 = vmatpush1.bf16.msra.mxu0 0
    %283 = vmatprep.subr.bf16.mxu0 0
    %284 = vmatpush1.bf16.msra.mxu0 0
    %285 = vmatprep.subr.bf16.mxu0 0
    %286 = vmatpush1.bf16.msra.mxu0 0
    %287 = vmatprep.subr.bf16.mxu0 0
    %288 = vmatpush1.bf16.msra.mxu0 0
    %289 = vmatprep.subr.bf16.mxu0 0
    %290 = vmatpush1.bf16.msra.mxu0 0
    %291 = vmatprep.subr.bf16.mxu0 0
    %292 = vmatpush1.bf16.msra.mxu0 0
    %293 = vmatprep.subr.bf16.mxu0 0
    %294 = vmatpush1.bf16.msra.mxu0 0
    %295 = vmatprep.mubr.bf16.mxu0 0
    %296 = vmatmul.mubr.bf16.gmra.mrb[0].mxu0 %v179
    %v297 = vpop.f32.mrb[0].mxu0
    %v298 = vadd.f32 %v128, %v297
    %v299 = vpop.f32.mrb[0].mxu0
    %v300 = vadd.f32 %v132, %v299
    %v301 = vpop.f32.mrb[0].mxu0
    %v302 = vadd.f32 %v128, %v301
    %v303 = vpop.f32.mrb[0].mxu0
    %v304 = vadd.f32 %v132, %v303
    %305 = vmatprep.mubr.bf16.mxu0 0
    %306 = vmatmul.mubr.bf16.gmra.mrb[0].mxu0 %v182
    %v307 = vpop.f32.mrb[0].mxu0
    %v308 = vadd.f32 %v128, %v307
    %v309 = vpop.f32.mrb[0].mxu0
    %v310 = vadd.f32 %v132, %v309
    %v311 = vpop.f32.mrb[0].mxu0
    %v312 = vadd.f32 %v128, %v311
    %v313 = vpop.f32.mrb[0].mxu0
    %v314 = vadd.f32 %v132, %v313
    %315 = vmatprep.mubr.bf16.mxu0 0
    %316 = vmatmul.mubr.bf16.gmra.mrb[0].mxu0 %v185
    %v317 = vpop.f32.mrb[0].mxu0
    %v318 = vadd.f32 %v128, %v317
    %v319 = vpop.f32.mrb[0].mxu0
    %v320 = vadd.f32 %v132, %v319
    %v321 = vpop.f32.mrb[0].mxu0
    %v322 = vadd.f32 %v128, %v321
    %v323 = vpop.f32.mrb[0].mxu0
    %v324 = vadd.f32 %v132, %v323
    %325 = vmatprep.mubr.bf16.mxu0 0
    %326 = vmatmul.mubr.bf16.gmra.mrb[0].mxu0 %v188
    %v327 = vpop.f32.mrb[0].mxu0
    %v328 = vadd.f32 %v128, %v327
    %v329 = vpop.f32.mrb[0].mxu0
    %v330 = vadd.f32 %v132, %v329
    %v331 = vpop.f32.mrb[0].mxu0
    %v332 = vadd.f32 %v128, %v331
    %v333 = vpop.f32.mrb[0].mxu0
    %v334 = vadd.f32 %v132, %v333
    %335 = vdwg.mxu0
    %336 = vst [vmem:[#allocation2] sm:$0xff] %v225
    %337 = vst [vmem:[#allocation2 + $0x8] sm:$0xff] %v227
    %338 = vst [vmem:[#allocation2 + $0x10] sm:$0xff] %v298
    %339 = vst [vmem:[#allocation2 + $0x18] sm:$0xff] %v300
    %340 = vst [vmem:[#allocation2 + $0x20] sm:$0xff] %v229
    %341 = vst [vmem:[#allocation2 + $0x28] sm:$0xff] %v231
    %342 = vst [vmem:[#allocation2 + $0x30] sm:$0xff] %v302
    %343 = vst [vmem:[#allocation2 + $0x38] sm:$0xff] %v304
    %344 = vst [vmem:[#allocation2 + $0x40] sm:$0xff] %v235
    %345 = vst [vmem:[#allocation2 + $0x48] sm:$0xff] %v237
    %346 = vst [vmem:[#allocation2 + $0x50] sm:$0xff] %v308
    %347 = vst [vmem:[#allocation2 + $0x58] sm:$0xff] %v310
    %348 = vst [vmem:[#allocation2 + $0x60] sm:$0xff] %v239
    %349 = vst [vmem:[#allocation2 + $0x68] sm:$0xff] %v241
    %350 = vst [vmem:[#allocation2 + $0x70] sm:$0xff] %v312
    %351 = vst [vmem:[#allocation2 + $0x78] sm:$0xff] %v314
    %352 = vst [vmem:[#allocation2 + $0x80] sm:$0xff] %v245
    %353 = vst [vmem:[#allocation2 + $0x88] sm:$0xff] %v247
    %354 = vst [vmem:[#allocation2 + $0x90] sm:$0xff] %v318
    %355 = vst [vmem:[#allocation2 + $0x98] sm:$0xff] %v320
    %356 = vst [vmem:[#allocation2 + $0xa0] sm:$0xff] %v249
    %357 = vst [vmem:[#allocation2 + $0xa8] sm:$0xff] %v251
    %358 = vst [vmem:[#allocation2 + $0xb0] sm:$0xff] %v322
    %359 = vst [vmem:[#allocation2 + $0xb8] sm:$0xff] %v324
    %360 = vst [vmem:[#allocation2 + $0xc0] sm:$0xff] %v255
    %361 = vst [vmem:[#allocation2 + $0xc8] sm:$0xff] %v257
    %362 = vst [vmem:[#allocation2 + $0xd0] sm:$0xff] %v328
    %363 = vst [vmem:[#allocation2 + $0xd8] sm:$0xff] %v330
    %364 = vst [vmem:[#allocation2 + $0xe0] sm:$0xff] %v259
    %365 = vst [vmem:[#allocation2 + $0xe8] sm:$0xff] %v261
    %366 = vst [vmem:[#allocation2 + $0xf0] sm:$0xff] %v332
    %367 = vst [vmem:[#allocation2 + $0xf8] sm:$0xff] %v334
    %v368 = vld [vmem:[#allocation4] sm:$0xff]
    %v369 = vld [vmem:[#allocation4 + $0x8] sm:$0xff]
    %v370 = vld [vmem:[#allocation4 + $0x10] sm:$0xff]
    %v371 = vld [vmem:[#allocation4 + $0x18] sm:$0xff]
    %v372 = vld [vmem:[#allocation4 + $0x20] sm:$0xff]
    %v373 = vld [vmem:[#allocation4 + $0x28] sm:$0xff]
    %v374 = vld [vmem:[#allocation4 + $0x30] sm:$0xff]
    %v375 = vld [vmem:[#allocation4 + $0x38] sm:$0xff]
    %v376 = vld [vmem:[#allocation4 + $0x40] sm:$0xff]
    %v377 = vld [vmem:[#allocation4 + $0x48] sm:$0xff]
    %v378 = vld [vmem:[#allocation4 + $0x50] sm:$0xff]
    %v379 = vld [vmem:[#allocation4 + $0x58] sm:$0xff]
    %v380 = vld [vmem:[#allocation4 + $0x60] sm:$0xff]
    %v381 = vld [vmem:[#allocation4 + $0x68] sm:$0xff]
    %v382 = vld [vmem:[#allocation4 + $0x70] sm:$0xff]
    %v383 = vld [vmem:[#allocation4 + $0x78] sm:$0xff]
    %v384 = vld [vmem:[#allocation4 + $0x80] sm:$0xff]
    %v385 = vld [vmem:[#allocation4 + $0x88] sm:$0xff]
    %v386 = vld [vmem:[#allocation4 + $0x90] sm:$0xff]
    %v387 = vld [vmem:[#allocation4 + $0x98] sm:$0xff]
    %v388 = vld [vmem:[#allocation4 + $0xa0] sm:$0xff]
    %v389 = vld [vmem:[#allocation4 + $0xa8] sm:$0xff]
    %v390 = vld [vmem:[#allocation4 + $0xb0] sm:$0xff]
    %v391 = vld [vmem:[#allocation4 + $0xb8] sm:$0xff]
    %v392 = vld [vmem:[#allocation4 + $0xc0] sm:$0xff]
    %v393 = vld [vmem:[#allocation4 + $0xc8] sm:$0xff]
    %v394 = vld [vmem:[#allocation4 + $0xd0] sm:$0xff]
    %v395 = vld [vmem:[#allocation4 + $0xd8] sm:$0xff]
    %v396 = vld [vmem:[#allocation4 + $0xe0] sm:$0xff]
    %v397 = vld [vmem:[#allocation4 + $0xe8] sm:$0xff]
    %v398 = vld [vmem:[#allocation4 + $0xf0] sm:$0xff]
    %v399 = vld [vmem:[#allocation4 + $0xf8] sm:$0xff]
    %v400 = vld [vmem:[#allocation2] sm:$0xff]
    %v401 = vld [vmem:[#allocation2 + $0x8] sm:$0xff]
    %v402 = vld [vmem:[#allocation2 + $0x10] sm:$0xff]
    %v403 = vld [vmem:[#allocation2 + $0x18] sm:$0xff]
    %v436 = vunpack.c.l.b16 %v368
    %v437 = vunpack.c.h.b16 %v368
    %v438 = vunpack.c.l.b16 %v369
    %v439 = vunpack.c.h.b16 %v369
    %v440 = vunpack.c.l.b16 %v370
    %v441 = vunpack.c.h.b16 %v370
    %v442 = vunpack.c.l.b16 %v371
    %v443 = vunpack.c.h.b16 %v371
    %v444 = vunpack.c.l.b16 %v372
    %v445 = vunpack.c.h.b16 %v372
    %v446 = vunpack.c.l.b16 %v373
    %v447 = vunpack.c.h.b16 %v373
    %v448 = vunpack.c.l.b16 %v374
    %v449 = vunpack.c.h.b16 %v374
    %v450 = vunpack.c.l.b16 %v375
    %v451 = vunpack.c.h.b16 %v375
    %v452 = vunpack.c.l.b16 %v376
    %v453 = vunpack.c.h.b16 %v376
    %v454 = vunpack.c.l.b16 %v377
    %v455 = vunpack.c.h.b16 %v377
    %v456 = vunpack.c.l.b16 %v378
    %v457 = vunpack.c.h.b16 %v378
    %v458 = vunpack.c.l.b16 %v379
    %v459 = vunpack.c.h.b16 %v379
    %v460 = vunpack.c.l.b16 %v380
    %v461 = vunpack.c.h.b16 %v380
    %v462 = vunpack.c.l.b16 %v381
    %v463 = vunpack.c.h.b16 %v381
    %v464 = vunpack.c.l.b16 %v382
    %v465 = vunpack.c.h.b16 %v382
    %v466 = vunpack.c.l.b16 %v383
    %v467 = vunpack.c.h.b16 %v383
    %v468 = vunpack.c.l.b16 %v384
    %v469 = vunpack.c.h.b16 %v384
    %v470 = vunpack.c.l.b16 %v385
    %v471 = vunpack.c.h.b16 %v385
    %v472 = vunpack.c.l.b16 %v386
    %v473 = vunpack.c.h.b16 %v386
    %v474 = vunpack.c.l.b16 %v387
    %v475 = vunpack.c.h.b16 %v387
    %v476 = vunpack.c.l.b16 %v388
    %v477 = vunpack.c.h.b16 %v388
    %v478 = vunpack.c.l.b16 %v389
    %v479 = vunpack.c.h.b16 %v389
    %v480 = vunpack.c.l.b16 %v390
    %v481 = vunpack.c.h.b16 %v390
    %v482 = vunpack.c.l.b16 %v391
    %v483 = vunpack.c.h.b16 %v391
    %v484 = vunpack.c.l.b16 %v392
    %v485 = vunpack.c.h.b16 %v392
    %v486 = vunpack.c.l.b16 %v393
    %v487 = vunpack.c.h.b16 %v393
    %v488 = vunpack.c.l.b16 %v394
    %v489 = vunpack.c.h.b16 %v394
    %v490 = vunpack.c.l.b16 %v395
    %v491 = vunpack.c.h.b16 %v395
    %v492 = vunpack.c.l.b16 %v396
    %v493 = vunpack.c.h.b16 %v396
    %v494 = vunpack.c.l.b16 %v397
    %v495 = vunpack.c.h.b16 %v397
    %v496 = vunpack.c.l.b16 %v398
    %v497 = vunpack.c.h.b16 %v398
    %v498 = vunpack.c.l.b16 %v399
    %v499 = vunpack.c.h.b16 %v399
    %v500 = vpack.c.b16 %v440, %v436
    %v501 = vpack.c.b16 %v441, %v437
    %v502 = vpack.c.b16 %v442, %v438
    %v503 = vpack.c.b16 %v443, %v439
    %v504 = vpack.c.b16 %v448, %v444
    %v505 = vpack.c.b16 %v449, %v445
    %v506 = vpack.c.b16 %v450, %v446
    %v507 = vpack.c.b16 %v451, %v447
    %v508 = vpack.c.b16 %v456, %v452
    %v509 = vpack.c.b16 %v457, %v453
    %v510 = vpack.c.b16 %v458, %v454
    %v511 = vpack.c.b16 %v459, %v455
    %v512 = vpack.c.b16 %v464, %v460
    %v513 = vpack.c.b16 %v465, %v461
    %v514 = vpack.c.b16 %v466, %v462
    %v515 = vpack.c.b16 %v467, %v463
    %v516 = vpack.c.b16 %v472, %v468
    %v517 = vpack.c.b16 %v473, %v469
    %v518 = vpack.c.b16 %v474, %v470
    %v519 = vpack.c.b16 %v475, %v471
    %v520 = vpack.c.b16 %v480, %v476
    %v521 = vpack.c.b16 %v481, %v477
    %v522 = vpack.c.b16 %v482, %v478
    %v523 = vpack.c.b16 %v483, %v479
    %v524 = vpack.c.b16 %v488, %v484
    %v525 = vpack.c.b16 %v489, %v485
    %v526 = vpack.c.b16 %v490, %v486
    %v527 = vpack.c.b16 %v491, %v487
    %v528 = vpack.c.b16 %v496, %v492
    %v529 = vpack.c.b16 %v497, %v493
    %v530 = vpack.c.b16 %v498, %v494
    %v531 = vpack.c.b16 %v499, %v495
    %564 = vmatprep.subr.bf16.mxu0 %v501
    %565 = vmatpush1.bf16.msra.mxu0 %v500
    %566 = vmatprep.subr.bf16.mxu0 %v505
    %567 = vmatpush1.bf16.msra.mxu0 %v504
    %568 = vmatprep.subr.bf16.mxu0 %v509
    %569 = vmatpush1.bf16.msra.mxu0 %v508
    %570 = vmatprep.subr.bf16.mxu0 %v513
    %571 = vmatpush1.bf16.msra.mxu0 %v512
    %572 = vmatprep.subr.bf16.mxu0 %v517
    %573 = vmatpush1.bf16.msra.mxu0 %v516
    %574 = vmatprep.subr.bf16.mxu0 %v521
    %575 = vmatpush1.bf16.msra.mxu0 %v520
    %576 = vmatprep.subr.bf16.mxu0 %v525
    %577 = vmatpush1.bf16.msra.mxu0 %v524
    %578 = vmatprep.subr.bf16.mxu0 %v529
    %579 = vmatpush1.bf16.msra.mxu0 %v528
    %580 = vmatprep.subr.bf16.mxu0 0
    %581 = vmatpush1.bf16.msra.mxu0 0
    %582 = vmatprep.subr.bf16.mxu0 0
    %583 = vmatpush1.bf16.msra.mxu0 0
    %584 = vmatprep.subr.bf16.mxu0 0
    %585 = vmatpush1.bf16.msra.mxu0 0
    %586 = vmatprep.subr.bf16.mxu0 0
    %587 = vmatpush1.bf16.msra.mxu0 0
    %588 = vmatprep.subr.bf16.mxu0 0
    %589 = vmatpush1.bf16.msra.mxu0 0
    %590 = vmatprep.subr.bf16.mxu0 0
    %591 = vmatpush1.bf16.msra.mxu0 0
    %592 = vmatprep.subr.bf16.mxu0 0
    %593 = vmatpush1.bf16.msra.mxu0 0
    %594 = vmatprep.subr.bf16.mxu0 0
    %595 = vmatpush1.bf16.msra.mxu0 0
    %596 = vmatprep.mubr.bf16.mxu0 0
    %597 = vmatmul.mubr.bf16.gmra.mrb[0].mxu0 0
    %v598 = vpop.f32.mrb[0].mxu0
    %v599 = vadd.f32 0.0, %v598
    %v600 = vpop.f32.mrb[0].mxu0
    %v601 = vadd.f32 0.0, %v600
    %v602 = vpop.f32.mrb[0].mxu0
    %v603 = vpop.f32.mrb[0].mxu0
    %604 = vdwg.mxu0
    %605 = vmatprep.subr.bf16.mxu0 %v503
    %606 = vmatpush1.bf16.msra.mxu0 %v502
    %607 = vmatprep.subr.bf16.mxu0 %v507
    %608 = vmatpush1.bf16.msra.mxu0 %v506
    %609 = vmatprep.subr.bf16.mxu0 %v511
    %610 = vmatpush1.bf16.msra.mxu0 %v510
    %611 = vmatprep.subr.bf16.mxu0 %v515
    %612 = vmatpush1.bf16.msra.mxu0 %v514
    %613 = vmatprep.subr.bf16.mxu0 %v519
    %614 = vmatpush1.bf16.msra.mxu0 %v518
    %615 = vmatprep.subr.bf16.mxu0 %v523
    %616 = vmatpush1.bf16.msra.mxu0 %v522
    %617 = vmatprep.subr.bf16.mxu0 %v527
    %618 = vmatpush1.bf16.msra.mxu0 %v526
    %619 = vmatprep.subr.bf16.mxu0 %v531
    %620 = vmatpush1.bf16.msra.mxu0 %v530
    %621 = vmatprep.subr.bf16.mxu0 0
    %622 = vmatpush1.bf16.msra.mxu0 0
    %623 = vmatprep.subr.bf16.mxu0 0
    %624 = vmatpush1.bf16.msra.mxu0 0
    %625 = vmatprep.subr.bf16.mxu0 0
    %626 = vmatpush1.bf16.msra.mxu0 0
    %627 = vmatprep.subr.bf16.mxu0 0
    %628 = vmatpush1.bf16.msra.mxu0 0
    %629 = vmatprep.subr.bf16.mxu0 0
    %630 = vmatpush1.bf16.msra.mxu0 0
    %631 = vmatprep.subr.bf16.mxu0 0
    %632 = vmatpush1.bf16.msra.mxu0 0
    %633 = vmatprep.subr.bf16.mxu0 0
    %634 = vmatpush1.bf16.msra.mxu0 0
    %635 = vmatprep.subr.bf16.mxu0 0
    %636 = vmatpush1.bf16.msra.mxu0 0
    %637 = vmatprep.mubr.bf16.mxu0 0
    %638 = vmatmul.mubr.bf16.gmra.mrb[0].mxu0 0
    %v639 = vpop.f32.mrb[0].mxu0
    %v640 = vadd.f32 0.0, %v639
    %v641 = vpop.f32.mrb[0].mxu0
    %v642 = vadd.f32 0.0, %v641
    %v643 = vpop.f32.mrb[0].mxu0
    %v644 = vpop.f32.mrb[0].mxu0
    %645 = vdwg.mxu0
    %v646 = vadd.f32 %v400, %v599
    %v647 = vadd.f32 %v401, %v601
    %v648 = vadd.f32 %v402, %v640
    %v649 = vadd.f32 %v403, %v642
    %v650 = vxor.u32 %v646, 2147483648
    %v651 = vxor.u32 %v647, 2147483648
    %v652 = vxor.u32 %v648, 2147483648
    %v653 = vxor.u32 %v649, 2147483648
    %v654 = vmul.f32 %v650, 1.442695
    %v655 = vpow.pop %v654
    %v656 = vmul.f32 %v651, 1.442695
    %v657 = vpow.pop %v656
    %v658 = vmul.f32 %v652, 1.442695
    %v659 = vpow.pop %v658
    %v660 = vmul.f32 %v653, 1.442695
    %v661 = vpow.pop %v660
    %v662 = vadd.f32 %v655, 1.0
    %v663 = vadd.f32 %v657, 1.0
    %v664 = vadd.f32 %v659, 1.0
    %v665 = vadd.f32 %v661, 1.0
    %v666 = vrcp.pop %v662
    %v667 = vmul.f32 1.0, %v666
    %v668 = vrcp.pop %v663
    %v669 = vmul.f32 1.0, %v668
    %v670 = vrcp.pop %v664
    %v671 = vmul.f32 1.0, %v670
    %v672 = vrcp.pop %v665
    %v673 = vmul.f32 1.0, %v672
    %v674 = vmul.f32 %v671, 2.0
    %v675 = vsub.f32 %v674, 1.0
    %v676 = vmul.f32 %v669, 0.0
    %v677 = vmul.f32 %v667, %v675
    %v678 = vadd.f32 %v676, %v677
    %v679 = vtanh.pop %v678
    %v680 = vmul.f32 %v673, %v679
    %681 = vst [vmem:[#allocation3] sm:$0xff] %v680
    %v682 = vld [vmem:[#allocation2 + $0x20] sm:$0xff]
    %v683 = vld [vmem:[#allocation2 + $0x28] sm:$0xff]
    %v684 = vld [vmem:[#allocation2 + $0x30] sm:$0xff]
    %v685 = vld [vmem:[#allocation2 + $0x38] sm:$0xff]
    %v686 = vpack.c.bf16 %v680, %v680
    %687 = vmatprep.subr.bf16.mxu0 %v501
    %688 = vmatpush1.bf16.msra.mxu0 %v500
    %689 = vmatprep.subr.bf16.mxu0 %v505
    %690 = vmatpush1.bf16.msra.mxu0 %v504
    %691 = vmatprep.subr.bf16.mxu0 %v509
    %692 = vmatpush1.bf16.msra.mxu0 %v508
    %693 = vmatprep.subr.bf16.mxu0 %v513
    %694 = vmatpush1.bf16.msra.mxu0 %v512
    %695 = vmatprep.subr.bf16.mxu0 %v517
    %696 = vmatpush1.bf16.msra.mxu0 %v516
    %697 = vmatprep.subr.bf16.mxu0 %v521
    %698 = vmatpush1.bf16.msra.mxu0 %v520
    %699 = vmatprep.subr.bf16.mxu0 %v525
    %700 = vmatpush1.bf16.msra.mxu0 %v524
    %701 = vmatprep.subr.bf16.mxu0 %v529
    %702 = vmatpush1.bf16.msra.mxu0 %v528
    %703 = vmatprep.subr.bf16.mxu0 0
    %704 = vmatpush1.bf16.msra.mxu0 0
    %705 = vmatprep.subr.bf16.mxu0 0
    %706 = vmatpush1.bf16.msra.mxu0 0
    %707 = vmatprep.subr.bf16.mxu0 0
    %708 = vmatpush1.bf16.msra.mxu0 0
    %709 = vmatprep.subr.bf16.mxu0 0
    %710 = vmatpush1.bf16.msra.mxu0 0
    %711 = vmatprep.subr.bf16.mxu0 0
    %712 = vmatpush1.bf16.msra.mxu0 0
    %713 = vmatprep.subr.bf16.mxu0 0
    %714 = vmatpush1.bf16.msra.mxu0 0
    %715 = vmatprep.subr.bf16.mxu0 0
    %716 = vmatpush1.bf16.msra.mxu0 0
    %717 = vmatprep.subr.bf16.mxu0 0
    %718 = vmatpush1.bf16.msra.mxu0 0
    %719 = vmatprep.mubr.bf16.mxu0 0
    %720 = vmatmul.mubr.bf16.gmra.mrb[0].mxu0 %v686
    %v721 = vpop.f32.mrb[0].mxu0
    %v722 = vadd.f32 0.0, %v721
    %v723 = vpop.f32.mrb[0].mxu0
    %v724 = vadd.f32 0.0, %v723
    %v725 = vpop.f32.mrb[0].mxu0
    %v726 = vpop.f32.mrb[0].mxu0
    %727 = vdwg.mxu0
    %728 = vmatprep.subr.bf16.mxu0 %v503
    %729 = vmatpush1.bf16.msra.mxu0 %v502
    %730 = vmatprep.subr.bf16.mxu0 %v507
    %731 = vmatpush1.bf16.msra.mxu0 %v506
    %732 = vmatprep.subr.bf16.mxu0 %v511
    %733 = vmatpush1.bf16.msra.mxu0 %v510
    %734 = vmatprep.subr.bf16.mxu0 %v515
    %735 = vmatpush1.bf16.msra.mxu0 %v514
    %736 = vmatprep.subr.bf16.mxu0 %v519
    %737 = vmatpush1.bf16.msra.mxu0 %v518
    %738 = vmatprep.subr.bf16.mxu0 %v523
    %739 = vmatpush1.bf16.msra.mxu0 %v522
    %740 = vmatprep.subr.bf16.mxu0 %v527
    %741 = vmatpush1.bf16.msra.mxu0 %v526
    %742 = vmatprep.subr.bf16.mxu0 %v531
    %743 = vmatpush1.bf16.msra.mxu0 %v530
    %744 = vmatprep.subr.bf16.mxu0 0
    %745 = vmatpush1.bf16.msra.mxu0 0
    %746 = vmatprep.subr.bf16.mxu0 0
    %747 = vmatpush1.bf16.msra.mxu0 0
    %748 = vmatprep.subr.bf16.mxu0 0
    %749 = vmatpush1.bf16.msra.mxu0 0
    %750 = vmatprep.subr.bf16.mxu0 0
    %751 = vmatpush1.bf16.msra.mxu0 0
    %752 = vmatprep.subr.bf16.mxu0 0
    %753 = vmatpush1.bf16.msra.mxu0 0
    %754 = vmatprep.subr.bf16.mxu0 0
    %755 = vmatpush1.bf16.msra.mxu0 0
    %756 = vmatprep.subr.bf16.mxu0 0
    %757 = vmatpush1.bf16.msra.mxu0 0
    %758 = vmatprep.subr.bf16.mxu0 0
    %759 = vmatpush1.bf16.msra.mxu0 0
    %760 = vmatprep.mubr.bf16.mxu0 0
    %761 = vmatmul.mubr.bf16.gmra.mrb[0].mxu0 %v686
    %v762 = vpop.f32.mrb[0].mxu0
    %v763 = vadd.f32 0.0, %v762
    %v764 = vpop.f32.mrb[0].mxu0
    %v765 = vadd.f32 0.0, %v764
    %v766 = vpop.f32.mrb[0].mxu0
    %v767 = vpop.f32.mrb[0].mxu0
    %768 = vdwg.mxu0
    %v769 = vadd.f32 %v682, %v722
    %v770 = vadd.f32 %v683, %v724
    %v771 = vadd.f32 %v684, %v763
    %v772 = vadd.f32 %v685, %v765
    %v773 = vxor.u32 %v769, 2147483648
    %v774 = vxor.u32 %v770, 2147483648
    %v775 = vxor.u32 %v771, 2147483648
    %v776 = vxor.u32 %v772, 2147483648
    %v777 = vmul.f32 %v773, 1.442695
    %v778 = vpow.pop %v777
    %v779 = vmul.f32 %v774, 1.442695
    %v780 = vpow.pop %v779
    %v781 = vmul.f32 %v775, 1.442695
    %v782 = vpow.pop %v781
    %v783 = vmul.f32 %v776, 1.442695
    %v784 = vpow.pop %v783
    %v785 = vadd.f32 %v778, 1.0
    %v786 = vadd.f32 %v780, 1.0
    %v787 = vadd.f32 %v782, 1.0
    %v788 = vadd.f32 %v784, 1.0
    %v789 = vrcp.pop %v785
    %v790 = vmul.f32 1.0, %v789
    %v791 = vrcp.pop %v786
    %v792 = vmul.f32 1.0, %v791
    %v793 = vrcp.pop %v787
    %v794 = vmul.f32 1.0, %v793
    %v795 = vrcp.pop %v788
    %v796 = vmul.f32 1.0, %v795
    %v797 = vmul.f32 %v794, 2.0
    %v798 = vsub.f32 %v797, 1.0
    %v799 = vmul.f32 %v792, %v678
    %v800 = vmul.f32 %v790, %v798
    %v801 = vadd.f32 %v799, %v800
    %v802 = vtanh.pop %v801
    %v803 = vmul.f32 %v796, %v802
    %804 = vst [vmem:[#allocation3 + $0x8] sm:$0xff] %v803
    %v805 = vld [vmem:[#allocation2 + $0x40] sm:$0xff]
    %v806 = vld [vmem:[#allocation2 + $0x48] sm:$0xff]
    %v807 = vld [vmem:[#allocation2 + $0x50] sm:$0xff]
    %v808 = vld [vmem:[#allocation2 + $0x58] sm:$0xff]
    %v809 = vpack.c.bf16 %v803, %v803
    %810 = vmatprep.subr.bf16.mxu0 %v501
    %811 = vmatpush1.bf16.msra.mxu0 %v500
    %812 = vmatprep.subr.bf16.mxu0 %v505
    %813 = vmatpush1.bf16.msra.mxu0 %v504
    %814 = vmatprep.subr.bf16.mxu0 %v509
    %815 = vmatpush1.bf16.msra.mxu0 %v508
    %816 = vmatprep.subr.bf16.mxu0 %v513
    %817 = vmatpush1.bf16.msra.mxu0 %v512
    %818 = vmatprep.subr.bf16.mxu0 %v517
    %819 = vmatpush1.bf16.msra.mxu0 %v516
    %820 = vmatprep.subr.bf16.mxu0 %v521
    %821 = vmatpush1.bf16.msra.mxu0 %v520
    %822 = vmatprep.subr.bf16.mxu0 %v525
    %823 = vmatpush1.bf16.msra.mxu0 %v524
    %824 = vmatprep.subr.bf16.mxu0 %v529
    %825 = vmatpush1.bf16.msra.mxu0 %v528
    %826 = vmatprep.subr.bf16.mxu0 0
    %827 = vmatpush1.bf16.msra.mxu0 0
    %828 = vmatprep.subr.bf16.mxu0 0
    %829 = vmatpush1.bf16.msra.mxu0 0
    %830 = vmatprep.subr.bf16.mxu0 0
    %831 = vmatpush1.bf16.msra.mxu0 0
    %832 = vmatprep.subr.bf16.mxu0 0
    %833 = vmatpush1.bf16.msra.mxu0 0
    %834 = vmatprep.subr.bf16.mxu0 0
    %835 = vmatpush1.bf16.msra.mxu0 0
    %836 = vmatprep.subr.bf16.mxu0 0
    %837 = vmatpush1.bf16.msra.mxu0 0
    %838 = vmatprep.subr.bf16.mxu0 0
    %839 = vmatpush1.bf16.msra.mxu0 0
    %840 = vmatprep.subr.bf16.mxu0 0
    %841 = vmatpush1.bf16.msra.mxu0 0
    %842 = vmatprep.mubr.bf16.mxu0 0
    %843 = vmatmul.mubr.bf16.gmra.mrb[0].mxu0 %v809
    %v844 = vpop.f32.mrb[0].mxu0
    %v845 = vadd.f32 0.0, %v844
    %v846 = vpop.f32.mrb[0].mxu0
    %v847 = vadd.f32 0.0, %v846
    %v848 = vpop.f32.mrb[0].mxu0
    %v849 = vpop.f32.mrb[0].mxu0
    %850 = vdwg.mxu0
    %851 = vmatprep.subr.bf16.mxu0 %v503
    %852 = vmatpush1.bf16.msra.mxu0 %v502
    %853 = vmatprep.subr.bf16.mxu0 %v507
    %854 = vmatpush1.bf16.msra.mxu0 %v506
    %855 = vmatprep.subr.bf16.mxu0 %v511
    %856 = vmatpush1.bf16.msra.mxu0 %v510
    %857 = vmatprep.subr.bf16.mxu0 %v515
    %858 = vmatpush1.bf16.msra.mxu0 %v514
    %859 = vmatprep.subr.bf16.mxu0 %v519
    %860 = vmatpush1.bf16.msra.mxu0 %v518
    %861 = vmatprep.subr.bf16.mxu0 %v523
    %862 = vmatpush1.bf16.msra.mxu0 %v522
    %863 = vmatprep.subr.bf16.mxu0 %v527
    %864 = vmatpush1.bf16.msra.mxu0 %v526
    %865 = vmatprep.subr.bf16.mxu0 %v531
    %866 = vmatpush1.bf16.msra.mxu0 %v530
    %867 = vmatprep.subr.bf16.mxu0 0
    %868 = vmatpush1.bf16.msra.mxu0 0
    %869 = vmatprep.subr.bf16.mxu0 0
    %870 = vmatpush1.bf16.msra.mxu0 0
    %871 = vmatprep.subr.bf16.mxu0 0
    %872 = vmatpush1.bf16.msra.mxu0 0
    %873 = vmatprep.subr.bf16.mxu0 0
    %874 = vmatpush1.bf16.msra.mxu0 0
    %875 = vmatprep.subr.bf16.mxu0 0
    %876 = vmatpush1.bf16.msra.mxu0 0
    %877 = vmatprep.subr.bf16.mxu0 0
    %878 = vmatpush1.bf16.msra.mxu0 0
    %879 = vmatprep.subr.bf16.mxu0 0
    %880 = vmatpush1.bf16.msra.mxu0 0
    %881 = vmatprep.subr.bf16.mxu0 0
    %882 = vmatpush1.bf16.msra.mxu0 0
    %883 = vmatprep.mubr.bf16.mxu0 0
    %884 = vmatmul.mubr.bf16.gmra.mrb[0].mxu0 %v809
    %v885 = vpop.f32.mrb[0].mxu0
    %v886 = vadd.f32 0.0, %v885
    %v887 = vpop.f32.mrb[0].mxu0
    %v888 = vadd.f32 0.0, %v887
    %v889 = vpop.f32.mrb[0].mxu0
    %v890 = vpop.f32.mrb[0].mxu0
    %891 = vdwg.mxu0
    %v892 = vadd.f32 %v805, %v845
    %v893 = vadd.f32 %v806, %v847
    %v894 = vadd.f32 %v807, %v886
    %v895 = vadd.f32 %v808, %v888
    %v896 = vxor.u32 %v892, 2147483648
    %v897 = vxor.u32 %v893, 2147483648
    %v898 = vxor.u32 %v894, 2147483648
    %v899 = vxor.u32 %v895, 2147483648
    %v900 = vmul.f32 %v896, 1.442695
    %v901 = vpow.pop %v900
    %v902 = vmul.f32 %v897, 1.442695
    %v903 = vpow.pop %v902
    %v904 = vmul.f32 %v898, 1.442695
    %v905 = vpow.pop %v904
    %v906 = vmul.f32 %v899, 1.442695
    %v907 = vpow.pop %v906
    %v908 = vadd.f32 %v901, 1.0
    %v909 = vadd.f32 %v903, 1.0
    %v910 = vadd.f32 %v905, 1.0
    %v911 = vadd.f32 %v907, 1.0
    %v912 = vrcp.pop %v908
    %v913 = vmul.f32 1.0, %v912
    %v914 = vrcp.pop %v909
    %v915 = vmul.f32 1.0, %v914
    %v916 = vrcp.pop %v910
    %v917 = vmul.f32 1.0, %v916
    %v918 = vrcp.pop %v911
    %v919 = vmul.f32 1.0, %v918
    %v920 = vmul.f32 %v917, 2.0
    %v921 = vsub.f32 %v920, 1.0
    %v922 = vmul.f32 %v915, %v801
    %v923 = vmul.f32 %v913, %v921
    %v924 = vadd.f32 %v922, %v923
    %v925 = vtanh.pop %v924
    %v926 = vmul.f32 %v919, %v925
    %927 = vst [vmem:[#allocation3 + $0x10] sm:$0xff] %v926
    %v928 = vld [vmem:[#allocation2 + $0x60] sm:$0xff]
    %v929 = vld [vmem:[#allocation2 + $0x68] sm:$0xff]
    %v930 = vld [vmem:[#allocation2 + $0x70] sm:$0xff]
    %v931 = vld [vmem:[#allocation2 + $0x78] sm:$0xff]
    %v932 = vpack.c.bf16 %v926, %v926
    %933 = vmatprep.subr.bf16.mxu0 %v501
    %934 = vmatpush1.bf16.msra.mxu0 %v500
    %935 = vmatprep.subr.bf16.mxu0 %v505
    %936 = vmatpush1.bf16.msra.mxu0 %v504
    %937 = vmatprep.subr.bf16.mxu0 %v509
    %938 = vmatpush1.bf16.msra.mxu0 %v508
    %939 = vmatprep.subr.bf16.mxu0 %v513
    %940 = vmatpush1.bf16.msra.mxu0 %v512
    %941 = vmatprep.subr.bf16.mxu0 %v517
    %942 = vmatpush1.bf16.msra.mxu0 %v516
    %943 = vmatprep.subr.bf16.mxu0 %v521
    %944 = vmatpush1.bf16.msra.mxu0 %v520
    %945 = vmatprep.subr.bf16.mxu0 %v525
    %946 = vmatpush1.bf16.msra.mxu0 %v524
    %947 = vmatprep.subr.bf16.mxu0 %v529
    %948 = vmatpush1.bf16.msra.mxu0 %v528
    %949 = vmatprep.subr.bf16.mxu0 0
    %950 = vmatpush1.bf16.msra.mxu0 0
    %951 = vmatprep.subr.bf16.mxu0 0
    %952 = vmatpush1.bf16.msra.mxu0 0
    %953 = vmatprep.subr.bf16.mxu0 0
    %954 = vmatpush1.bf16.msra.mxu0 0
    %955 = vmatprep.subr.bf16.mxu0 0
    %956 = vmatpush1.bf16.msra.mxu0 0
    %957 = vmatprep.subr.bf16.mxu0 0
    %958 = vmatpush1.bf16.msra.mxu0 0
    %959 = vmatprep.subr.bf16.mxu0 0
    %960 = vmatpush1.bf16.msra.mxu0 0
    %961 = vmatprep.subr.bf16.mxu0 0
    %962 = vmatpush1.bf16.msra.mxu0 0
    %963 = vmatprep.subr.bf16.mxu0 0
    %964 = vmatpush1.bf16.msra.mxu0 0
    %965 = vmatprep.mubr.bf16.mxu0 0
    %966 = vmatmul.mubr.bf16.gmra.mrb[0].mxu0 %v932
    %v967 = vpop.f32.mrb[0].mxu0
    %v968 = vadd.f32 0.0, %v967
    %v969 = vpop.f32.mrb[0].mxu0
    %v970 = vadd.f32 0.0, %v969
    %v971 = vpop.f32.mrb[0].mxu0
    %v972 = vpop.f32.mrb[0].mxu0
    %973 = vdwg.mxu0
    %974 = vmatprep.subr.bf16.mxu0 %v503
    %975 = vmatpush1.bf16.msra.mxu0 %v502
    %976 = vmatprep.subr.bf16.mxu0 %v507
    %977 = vmatpush1.bf16.msra.mxu0 %v506
    %978 = vmatprep.subr.bf16.mxu0 %v511
    %979 = vmatpush1.bf16.msra.mxu0 %v510
    %980 = vmatprep.subr.bf16.mxu0 %v515
    %981 = vmatpush1.bf16.msra.mxu0 %v514
    %982 = vmatprep.subr.bf16.mxu0 %v519
    %983 = vmatpush1.bf16.msra.mxu0 %v518
    %984 = vmatprep.subr.bf16.mxu0 %v523
    %985 = vmatpush1.bf16.msra.mxu0 %v522
    %986 = vmatprep.subr.bf16.mxu0 %v527
    %987 = vmatpush1.bf16.msra.mxu0 %v526
    %988 = vmatprep.subr.bf16.mxu0 %v531
    %989 = vmatpush1.bf16.msra.mxu0 %v530
    %990 = vmatprep.subr.bf16.mxu0 0
    %991 = vmatpush1.bf16.msra.mxu0 0
    %992 = vmatprep.subr.bf16.mxu0 0
    %993 = vmatpush1.bf16.msra.mxu0 0
    %994 = vmatprep.subr.bf16.mxu0 0
    %995 = vmatpush1.bf16.msra.mxu0 0
    %996 = vmatprep.subr.bf16.mxu0 0
    %997 = vmatpush1.bf16.msra.mxu0 0
    %998 = vmatprep.subr.bf16.mxu0 0
    %999 = vmatpush1.bf16.msra.mxu0 0
    %1000 = vmatprep.subr.bf16.mxu0 0
    %1001 = vmatpush1.bf16.msra.mxu0 0
    %1002 = vmatprep.subr.bf16.mxu0 0
    %1003 = vmatpush1.bf16.msra.mxu0 0
    %1004 = vmatprep.subr.bf16.mxu0 0
    %1005 = vmatpush1.bf16.msra.mxu0 0
    %1006 = vmatprep.mubr.bf16.mxu0 0
    %1007 = vmatmul.mubr.bf16.gmra.mrb[0].mxu0 %v932
    %v1008 = vpop.f32.mrb[0].mxu0
    %v1009 = vadd.f32 0.0, %v1008
    %v1010 = vpop.f32.mrb[0].mxu0
    %v1011 = vadd.f32 0.0, %v1010
    %v1012 = vpop.f32.mrb[0].mxu0
    %v1013 = vpop.f32.mrb[0].mxu0
    %1014 = vdwg.mxu0
    %v1015 = vadd.f32 %v928, %v968
    %v1016 = vadd.f32 %v929, %v970
    %v1017 = vadd.f32 %v930, %v1009
    %v1018 = vadd.f32 %v931, %v1011
    %v1019 = vxor.u32 %v1015, 2147483648
    %v1020 = vxor.u32 %v1016, 2147483648
    %v1021 = vxor.u32 %v1017, 2147483648
    %v1022 = vxor.u32 %v1018, 2147483648
    %v1023 = vmul.f32 %v1019, 1.442695
    %v1024 = vpow.pop %v1023
    %v1025 = vmul.f32 %v1020, 1.442695
    %v1026 = vpow.pop %v1025
    %v1027 = vmul.f32 %v1021, 1.442695
    %v1028 = vpow.pop %v1027
    %v1029 = vmul.f32 %v1022, 1.442695
    %v1030 = vpow.pop %v1029
    %v1031 = vadd.f32 %v1024, 1.0
    %v1032 = vadd.f32 %v1026, 1.0
    %v1033 = vadd.f32 %v1028, 1.0
    %v1034 = vadd.f32 %v1030, 1.0
    %v1035 = vrcp.pop %v1031
    %v1036 = vmul.f32 1.0, %v1035
    %v1037 = vrcp.pop %v1032
    %v1038 = vmul.f32 1.0, %v1037
    %v1039 = vrcp.pop %v1033
    %v1040 = vmul.f32 1.0, %v1039
    %v1041 = vrcp.pop %v1034
    %v1042 = vmul.f32 1.0, %v1041
    %v1043 = vmul.f32 %v1040, 2.0
    %v1044 = vsub.f32 %v1043, 1.0
    %v1045 = vmul.f32 %v1038, %v924
    %v1046 = vmul.f32 %v1036, %v1044
    %v1047 = vadd.f32 %v1045, %v1046
    %v1048 = vtanh.pop %v1047
    %v1049 = vmul.f32 %v1042, %v1048
    %1050 = vst [vmem:[#allocation3 + $0x18] sm:$0xff] %v1049
    %v1051 = vld [vmem:[#allocation2 + $0x80] sm:$0xff]
    %v1052 = vld [vmem:[#allocation2 + $0x88] sm:$0xff]
    %v1053 = vld [vmem:[#allocation2 + $0x90] sm:$0xff]
    %v1054 = vld [vmem:[#allocation2 + $0x98] sm:$0xff]
    %v1055 = vpack.c.bf16 %v1049, %v1049
    %1056 = vmatprep.subr.bf16.mxu0 %v501
    %1057 = vmatpush1.bf16.msra.mxu0 %v500
    %1058 = vmatprep.subr.bf16.mxu0 %v505
    %1059 = vmatpush1.bf16.msra.mxu0 %v504
    %1060 = vmatprep.subr.bf16.mxu0 %v509
    %1061 = vmatpush1.bf16.msra.mxu0 %v508
    %1062 = vmatprep.subr.bf16.mxu0 %v513
    %1063 = vmatpush1.bf16.msra.mxu0 %v512
    %1064 = vmatprep.subr.bf16.mxu0 %v517
    %1065 = vmatpush1.bf16.msra.mxu0 %v516
    %1066 = vmatprep.subr.bf16.mxu0 %v521
    %1067 = vmatpush1.bf16.msra.mxu0 %v520
    %1068 = vmatprep.subr.bf16.mxu0 %v525
    %1069 = vmatpush1.bf16.msra.mxu0 %v524
    %1070 = vmatprep.subr.bf16.mxu0 %v529
    %1071 = vmatpush1.bf16.msra.mxu0 %v528
    %1072 = vmatprep.subr.bf16.mxu0 0
    %1073 = vmatpush1.bf16.msra.mxu0 0
    %1074 = vmatprep.subr.bf16.mxu0 0
    %1075 = vmatpush1.bf16.msra.mxu0 0
    %1076 = vmatprep.subr.bf16.mxu0 0
    %1077 = vmatpush1.bf16.msra.mxu0 0
    %1078 = vmatprep.subr.bf16.mxu0 0
    %1079 = vmatpush1.bf16.msra.mxu0 0
    %1080 = vmatprep.subr.bf16.mxu0 0
    %1081 = vmatpush1.bf16.msra.mxu0 0
    %1082 = vmatprep.subr.bf16.mxu0 0
    %1083 = vmatpush1.bf16.msra.mxu0 0
    %1084 = vmatprep.subr.bf16.mxu0 0
    %1085 = vmatpush1.bf16.msra.mxu0 0
    %1086 = vmatprep.subr.bf16.mxu0 0
    %1087 = vmatpush1.bf16.msra.mxu0 0
    %1088 = vmatprep.mubr.bf16.mxu0 0
    %1089 = vmatmul.mubr.bf16.gmra.mrb[0].mxu0 %v1055
    %v1090 = vpop.f32.mrb[0].mxu0
    %v1091 = vadd.f32 0.0, %v1090
    %v1092 = vpop.f32.mrb[0].mxu0
    %v1093 = vadd.f32 0.0, %v1092
    %v1094 = vpop.f32.mrb[0].mxu0
    %v1095 = vpop.f32.mrb[0].mxu0
    %1096 = vdwg.mxu0
    %1097 = vmatprep.subr.bf16.mxu0 %v503
    %1098 = vmatpush1.bf16.msra.mxu0 %v502
    %1099 = vmatprep.subr.bf16.mxu0 %v507
    %1100 = vmatpush1.bf16.msra.mxu0 %v506
    %1101 = vmatprep.subr.bf16.mxu0 %v511
    %1102 = vmatpush1.bf16.msra.mxu0 %v510
    %1103 = vmatprep.subr.bf16.mxu0 %v515
    %1104 = vmatpush1.bf16.msra.mxu0 %v514
    %1105 = vmatprep.subr.bf16.mxu0 %v519
    %1106 = vmatpush1.bf16.msra.mxu0 %v518
    %1107 = vmatprep.subr.bf16.mxu0 %v523
    %1108 = vmatpush1.bf16.msra.mxu0 %v522
    %1109 = vmatprep.subr.bf16.mxu0 %v527
    %1110 = vmatpush1.bf16.msra.mxu0 %v526
    %1111 = vmatprep.subr.bf16.mxu0 %v531
    %1112 = vmatpush1.bf16.msra.mxu0 %v530
    %1113 = vmatprep.subr.bf16.mxu0 0
    %1114 = vmatpush1.bf16.msra.mxu0 0
    %1115 = vmatprep.subr.bf16.mxu0 0
    %1116 = vmatpush1.bf16.msra.mxu0 0
    %1117 = vmatprep.subr.bf16.mxu0 0
    %1118 = vmatpush1.bf16.msra.mxu0 0
    %1119 = vmatprep.subr.bf16.mxu0 0
    %1120 = vmatpush1.bf16.msra.mxu0 0
    %1121 = vmatprep.subr.bf16.mxu0 0
    %1122 = vmatpush1.bf16.msra.mxu0 0
    %1123 = vmatprep.subr.bf16.mxu0 0
    %1124 = vmatpush1.bf16.msra.mxu0 0
    %1125 = vmatprep.subr.bf16.mxu0 0
    %1126 = vmatpush1.bf16.msra.mxu0 0
    %1127 = vmatprep.subr.bf16.mxu0 0
    %1128 = vmatpush1.bf16.msra.mxu0 0
    %1129 = vmatprep.mubr.bf16.mxu0 0
    %1130 = vmatmul.mubr.bf16.gmra.mrb[0].mxu0 %v1055
    %v1131 = vpop.f32.mrb[0].mxu0
    %v1132 = vadd.f32 0.0, %v1131
    %v1133 = vpop.f32.mrb[0].mxu0
    %v1134 = vadd.f32 0.0, %v1133
    %v1135 = vpop.f32.mrb[0].mxu0
    %v1136 = vpop.f32.mrb[0].mxu0
    %1137 = vdwg.mxu0
    %v1138 = vadd.f32 %v1051, %v1091
    %v1139 = vadd.f32 %v1052, %v1093
    %v1140 = vadd.f32 %v1053, %v1132
    %v1141 = vadd.f32 %v1054, %v1134
    %v1142 = vxor.u32 %v1138, 2147483648
    %v1143 = vxor.u32 %v1139, 2147483648
    %v1144 = vxor.u32 %v1140, 2147483648
    %v1145 = vxor.u32 %v1141, 2147483648
    %v1146 = vmul.f32 %v1142, 1.442695
    %v1147 = vpow.pop %v1146
    %v1148 = vmul.f32 %v1143, 1.442695
    %v1149 = vpow.pop %v1148
    %v1150 = vmul.f32 %v1144, 1.442695
    %v1151 = vpow.pop %v1150
    %v1152 = vmul.f32 %v1145, 1.442695
    %v1153 = vpow.pop %v1152
    %v1154 = vadd.f32 %v1147, 1.0
    %v1155 = vadd.f32 %v1149, 1.0
    %v1156 = vadd.f32 %v1151, 1.0
    %v1157 = vadd.f32 %v1153, 1.0
    %v1158 = vrcp.pop %v1154
    %v1159 = vmul.f32 1.0, %v1158
    %v1160 = vrcp.pop %v1155
    %v1161 = vmul.f32 1.0, %v1160
    %v1162 = vrcp.pop %v1156
    %v1163 = vmul.f32 1.0, %v1162
    %v1164 = vrcp.pop %v1157
    %v1165 = vmul.f32 1.0, %v1164
    %v1166 = vmul.f32 %v1163, 2.0
    %v1167 = vsub.f32 %v1166, 1.0
    %v1168 = vmul.f32 %v1161, %v1047
    %v1169 = vmul.f32 %v1159, %v1167
    %v1170 = vadd.f32 %v1168, %v1169
    %v1171 = vtanh.pop %v1170
    %v1172 = vmul.f32 %v1165, %v1171
    %1173 = vst [vmem:[#allocation3 + $0x20] sm:$0xff] %v1172
    %v1174 = vld [vmem:[#allocation2 + $0xa0] sm:$0xff]
    %v1175 = vld [vmem:[#allocation2 + $0xa8] sm:$0xff]
    %v1176 = vld [vmem:[#allocation2 + $0xb0] sm:$0xff]
    %v1177 = vld [vmem:[#allocation2 + $0xb8] sm:$0xff]
    %v1178 = vpack.c.bf16 %v1172, %v1172
    %1179 = vmatprep.subr.bf16.mxu0 %v501
    %1180 = vmatpush1.bf16.msra.mxu0 %v500
    %1181 = vmatprep.subr.bf16.mxu0 %v505
    %1182 = vmatpush1.bf16.msra.mxu0 %v504
    %1183 = vmatprep.subr.bf16.mxu0 %v509
    %1184 = vmatpush1.bf16.msra.mxu0 %v508
    %1185 = vmatprep.subr.bf16.mxu0 %v513
    %1186 = vmatpush1.bf16.msra.mxu0 %v512
    %1187 = vmatprep.subr.bf16.mxu0 %v517
    %1188 = vmatpush1.bf16.msra.mxu0 %v516
    %1189 = vmatprep.subr.bf16.mxu0 %v521
    %1190 = vmatpush1.bf16.msra.mxu0 %v520
    %1191 = vmatprep.subr.bf16.mxu0 %v525
    %1192 = vmatpush1.bf16.msra.mxu0 %v524
    %1193 = vmatprep.subr.bf16.mxu0 %v529
    %1194 = vmatpush1.bf16.msra.mxu0 %v528
    %1195 = vmatprep.subr.bf16.mxu0 0
    %1196 = vmatpush1.bf16.msra.mxu0 0
    %1197 = vmatprep.subr.bf16.mxu0 0
    %1198 = vmatpush1.bf16.msra.mxu0 0
    %1199 = vmatprep.subr.bf16.mxu0 0
    %1200 = vmatpush1.bf16.msra.mxu0 0
    %1201 = vmatprep.subr.bf16.mxu0 0
    %1202 = vmatpush1.bf16.msra.mxu0 0
    %1203 = vmatprep.subr.bf16.mxu0 0
    %1204 = vmatpush1.bf16.msra.mxu0 0
    %1205 = vmatprep.subr.bf16.mxu0 0
    %1206 = vmatpush1.bf16.msra.mxu0 0
    %1207 = vmatprep.subr.bf16.mxu0 0
    %1208 = vmatpush1.bf16.msra.mxu0 0
    %1209 = vmatprep.subr.bf16.mxu0 0
    %1210 = vmatpush1.bf16.msra.mxu0 0
    %1211 = vmatprep.mubr.bf16.mxu0 0
    %1212 = vmatmul.mubr.bf16.gmra.mrb[0].mxu0 %v1178
    %v1213 = vpop.f32.mrb[0].mxu0
    %v1214 = vadd.f32 0.0, %v1213
    %v1215 = vpop.f32.mrb[0].mxu0
    %v1216 = vadd.f32 0.0, %v1215
    %v1217 = vpop.f32.mrb[0].mxu0
    %v1218 = vpop.f32.mrb[0].mxu0
    %1219 = vdwg.mxu0
    %1220 = vmatprep.subr.bf16.mxu0 %v503
    %1221 = vmatpush1.bf16.msra.mxu0 %v502
    %1222 = vmatprep.subr.bf16.mxu0 %v507
    %1223 = vmatpush1.bf16.msra.mxu0 %v506
    %1224 = vmatprep.subr.bf16.mxu0 %v511
    %1225 = vmatpush1.bf16.msra.mxu0 %v510
    %1226 = vmatprep.subr.bf16.mxu0 %v515
    %1227 = vmatpush1.bf16.msra.mxu0 %v514
    %1228 = vmatprep.subr.bf16.mxu0 %v519
    %1229 = vmatpush1.bf16.msra.mxu0 %v518
    %1230 = vmatprep.subr.bf16.mxu0 %v523
    %1231 = vmatpush1.bf16.msra.mxu0 %v522
    %1232 = vmatprep.subr.bf16.mxu0 %v527
    %1233 = vmatpush1.bf16.msra.mxu0 %v526
    %1234 = vmatprep.subr.bf16.mxu0 %v531
    %1235 = vmatpush1.bf16.msra.mxu0 %v530
    %1236 = vmatprep.subr.bf16.mxu0 0
    %1237 = vmatpush1.bf16.msra.mxu0 0
    %1238 = vmatprep.subr.bf16.mxu0 0
    %1239 = vmatpush1.bf16.msra.mxu0 0
    %1240 = vmatprep.subr.bf16.mxu0 0
    %1241 = vmatpush1.bf16.msra.mxu0 0
    %1242 = vmatprep.subr.bf16.mxu0 0
    %1243 = vmatpush1.bf16.msra.mxu0 0
    %1244 = vmatprep.subr.bf16.mxu0 0
    %1245 = vmatpush1.bf16.msra.mxu0 0
    %1246 = vmatprep.subr.bf16.mxu0 0
    %1247 = vmatpush1.bf16.msra.mxu0 0
    %1248 = vmatprep.subr.bf16.mxu0 0
    %1249 = vmatpush1.bf16.msra.mxu0 0
    %1250 = vmatprep.subr.bf16.mxu0 0
    %1251 = vmatpush1.bf16.msra.mxu0 0
    %1252 = vmatprep.mubr.bf16.mxu0 0
    %1253 = vmatmul.mubr.bf16.gmra.mrb[0].mxu0 %v1178
    %v1254 = vpop.f32.mrb[0].mxu0
    %v1255 = vadd.f32 0.0, %v1254
    %v1256 = vpop.f32.mrb[0].mxu0
    %v1257 = vadd.f32 0.0, %v1256
    %v1258 = vpop.f32.mrb[0].mxu0
    %v1259 = vpop.f32.mrb[0].mxu0
    %1260 = vdwg.mxu0
    %v1261 = vadd.f32 %v1174, %v1214
    %v1262 = vadd.f32 %v1175, %v1216
    %v1263 = vadd.f32 %v1176, %v1255
    %v1264 = vadd.f32 %v1177, %v1257
    %v1265 = vxor.u32 %v1261, 2147483648
    %v1266 = vxor.u32 %v1262, 2147483648
    %v1267 = vxor.u32 %v1263, 2147483648
    %v1268 = vxor.u32 %v1264, 2147483648
    %v1269 = vmul.f32 %v1265, 1.442695
    %v1270 = vpow.pop %v1269
    %v1271 = vmul.f32 %v1266, 1.442695
    %v1272 = vpow.pop %v1271
    %v1273 = vmul.f32 %v1267, 1.442695
    %v1274 = vpow.pop %v1273
    %v1275 = vmul.f32 %v1268, 1.442695
    %v1276 = vpow.pop %v1275
    %v1277 = vadd.f32 %v1270, 1.0
    %v1278 = vadd.f32 %v1272, 1.0
    %v1279 = vadd.f32 %v1274, 1.0
    %v1280 = vadd.f32 %v1276, 1.0
    %v1281 = vrcp.pop %v1277
    %v1282 = vmul.f32 1.0, %v1281
    %v1283 = vrcp.pop %v1278
    %v1284 = vmul.f32 1.0, %v1283
    %v1285 = vrcp.pop %v1279
    %v1286 = vmul.f32 1.0, %v1285
    %v1287 = vrcp.pop %v1280
    %v1288 = vmul.f32 1.0, %v1287
    %v1289 = vmul.f32 %v1286, 2.0
    %v1290 = vsub.f32 %v1289, 1.0
    %v1291 = vmul.f32 %v1284, %v1170
    %v1292 = vmul.f32 %v1282, %v1290
    %v1293 = vadd.f32 %v1291, %v1292
    %v1294 = vtanh.pop %v1293
    %v1295 = vmul.f32 %v1288, %v1294
    %1296 = vst [vmem:[#allocation3 + $0x28] sm:$0xff] %v1295
    %v1297 = vld [vmem:[#allocation2 + $0xc0] sm:$0xff]
    %v1298 = vld [vmem:[#allocation2 + $0xc8] sm:$0xff]
    %v1299 = vld [vmem:[#allocation2 + $0xd0] sm:$0xff]
    %v1300 = vld [vmem:[#allocation2 + $0xd8] sm:$0xff]
    %v1301 = vpack.c.bf16 %v1295, %v1295
    %1302 = vmatprep.subr.bf16.mxu0 %v501
    %1303 = vmatpush1.bf16.msra.mxu0 %v500
    %1304 = vmatprep.subr.bf16.mxu0 %v505
    %1305 = vmatpush1.bf16.msra.mxu0 %v504
    %1306 = vmatprep.subr.bf16.mxu0 %v509
    %1307 = vmatpush1.bf16.msra.mxu0 %v508
    %1308 = vmatprep.subr.bf16.mxu0 %v513
    %1309 = vmatpush1.bf16.msra.mxu0 %v512
    %1310 = vmatprep.subr.bf16.mxu0 %v517
    %1311 = vmatpush1.bf16.msra.mxu0 %v516
    %1312 = vmatprep.subr.bf16.mxu0 %v521
    %1313 = vmatpush1.bf16.msra.mxu0 %v520
    %1314 = vmatprep.subr.bf16.mxu0 %v525
    %1315 = vmatpush1.bf16.msra.mxu0 %v524
    %1316 = vmatprep.subr.bf16.mxu0 %v529
    %1317 = vmatpush1.bf16.msra.mxu0 %v528
    %1318 = vmatprep.subr.bf16.mxu0 0
    %1319 = vmatpush1.bf16.msra.mxu0 0
    %1320 = vmatprep.subr.bf16.mxu0 0
    %1321 = vmatpush1.bf16.msra.mxu0 0
    %1322 = vmatprep.subr.bf16.mxu0 0
    %1323 = vmatpush1.bf16.msra.mxu0 0
    %1324 = vmatprep.subr.bf16.mxu0 0
    %1325 = vmatpush1.bf16.msra.mxu0 0
    %1326 = vmatprep.subr.bf16.mxu0 0
    %1327 = vmatpush1.bf16.msra.mxu0 0
    %1328 = vmatprep.subr.bf16.mxu0 0
    %1329 = vmatpush1.bf16.msra.mxu0 0
    %1330 = vmatprep.subr.bf16.mxu0 0
    %1331 = vmatpush1.bf16.msra.mxu0 0
    %1332 = vmatprep.subr.bf16.mxu0 0
    %1333 = vmatpush1.bf16.msra.mxu0 0
    %1334 = vmatprep.mubr.bf16.mxu0 0
    %1335 = vmatmul.mubr.bf16.gmra.mrb[0].mxu0 %v1301
    %v1336 = vpop.f32.mrb[0].mxu0
    %v1337 = vadd.f32 0.0, %v1336
    %v1338 = vpop.f32.mrb[0].mxu0
    %v1339 = vadd.f32 0.0, %v1338
    %v1340 = vpop.f32.mrb[0].mxu0
    %v1341 = vpop.f32.mrb[0].mxu0
    %1342 = vdwg.mxu0
    %1343 = vmatprep.subr.bf16.mxu0 %v503
    %1344 = vmatpush1.bf16.msra.mxu0 %v502
    %1345 = vmatprep.subr.bf16.mxu0 %v507
    %1346 = vmatpush1.bf16.msra.mxu0 %v506
    %1347 = vmatprep.subr.bf16.mxu0 %v511
    %1348 = vmatpush1.bf16.msra.mxu0 %v510
    %1349 = vmatprep.subr.bf16.mxu0 %v515
    %1350 = vmatpush1.bf16.msra.mxu0 %v514
    %1351 = vmatprep.subr.bf16.mxu0 %v519
    %1352 = vmatpush1.bf16.msra.mxu0 %v518
    %1353 = vmatprep.subr.bf16.mxu0 %v523
    %1354 = vmatpush1.bf16.msra.mxu0 %v522
    %1355 = vmatprep.subr.bf16.mxu0 %v527
    %1356 = vmatpush1.bf16.msra.mxu0 %v526
    %1357 = vmatprep.subr.bf16.mxu0 %v531
    %1358 = vmatpush1.bf16.msra.mxu0 %v530
    %1359 = vmatprep.subr.bf16.mxu0 0
    %1360 = vmatpush1.bf16.msra.mxu0 0
    %1361 = vmatprep.subr.bf16.mxu0 0
    %1362 = vmatpush1.bf16.msra.mxu0 0
    %1363 = vmatprep.subr.bf16.mxu0 0
    %1364 = vmatpush1.bf16.msra.mxu0 0
    %1365 = vmatprep.subr.bf16.mxu0 0
    %1366 = vmatpush1.bf16.msra.mxu0 0
    %1367 = vmatprep.subr.bf16.mxu0 0
    %1368 = vmatpush1.bf16.msra.mxu0 0
    %1369 = vmatprep.subr.bf16.mxu0 0
    %1370 = vmatpush1.bf16.msra.mxu0 0
    %1371 = vmatprep.subr.bf16.mxu0 0
    %1372 = vmatpush1.bf16.msra.mxu0 0
    %1373 = vmatprep.subr.bf16.mxu0 0
    %1374 = vmatpush1.bf16.msra.mxu0 0
    %1375 = vmatprep.mubr.bf16.mxu0 0
    %1376 = vmatmul.mubr.bf16.gmra.mrb[0].mxu0 %v1301
    %v1377 = vpop.f32.mrb[0].mxu0
    %v1378 = vadd.f32 0.0, %v1377
    %v1379 = vpop.f32.mrb[0].mxu0
    %v1380 = vadd.f32 0.0, %v1379
    %v1381 = vpop.f32.mrb[0].mxu0
    %v1382 = vpop.f32.mrb[0].mxu0
    %1383 = vdwg.mxu0
    %v1384 = vadd.f32 %v1297, %v1337
    %v1385 = vadd.f32 %v1298, %v1339
    %v1386 = vadd.f32 %v1299, %v1378
    %v1387 = vadd.f32 %v1300, %v1380
    %v1388 = vxor.u32 %v1384, 2147483648
    %v1389 = vxor.u32 %v1385, 2147483648
    %v1390 = vxor.u32 %v1386, 2147483648
    %v1391 = vxor.u32 %v1387, 2147483648
    %v1392 = vmul.f32 %v1388, 1.442695
    %v1393 = vpow.pop %v1392
    %v1394 = vmul.f32 %v1389, 1.442695
    %v1395 = vpow.pop %v1394
    %v1396 = vmul.f32 %v1390, 1.442695
    %v1397 = vpow.pop %v1396
    %v1398 = vmul.f32 %v1391, 1.442695
    %v1399 = vpow.pop %v1398
    %v1400 = vadd.f32 %v1393, 1.0
    %v1401 = vadd.f32 %v1395, 1.0
    %v1402 = vadd.f32 %v1397, 1.0
    %v1403 = vadd.f32 %v1399, 1.0
    %v1404 = vrcp.pop %v1400
    %v1405 = vmul.f32 1.0, %v1404
    %v1406 = vrcp.pop %v1401
    %v1407 = vmul.f32 1.0, %v1406
    %v1408 = vrcp.pop %v1402
    %v1409 = vmul.f32 1.0, %v1408
    %v1410 = vrcp.pop %v1403
    %v1411 = vmul.f32 1.0, %v1410
    %v1412 = vmul.f32 %v1409, 2.0
    %v1413 = vsub.f32 %v1412, 1.0
    %v1414 = vmul.f32 %v1407, %v1293
    %v1415 = vmul.f32 %v1405, %v1413
    %v1416 = vadd.f32 %v1414, %v1415
    %v1417 = vtanh.pop %v1416
    %v1418 = vmul.f32 %v1411, %v1417
    %1419 = vst [vmem:[#allocation3 + $0x30] sm:$0xff] %v1418
    %v1420 = vld [vmem:[#allocation2 + $0xe0] sm:$0xff]
    %v1421 = vld [vmem:[#allocation2 + $0xe8] sm:$0xff]
    %v1422 = vld [vmem:[#allocation2 + $0xf0] sm:$0xff]
    %v1423 = vld [vmem:[#allocation2 + $0xf8] sm:$0xff]
    %v1424 = vpack.c.bf16 %v1418, %v1418
    %1425 = vmatprep.subr.bf16.mxu0 %v501
    %1426 = vmatpush1.bf16.msra.mxu0 %v500
    %1427 = vmatprep.subr.bf16.mxu0 %v505
    %1428 = vmatpush1.bf16.msra.mxu0 %v504
    %1429 = vmatprep.subr.bf16.mxu0 %v509
    %1430 = vmatpush1.bf16.msra.mxu0 %v508
    %1431 = vmatprep.subr.bf16.mxu0 %v513
    %1432 = vmatpush1.bf16.msra.mxu0 %v512
    %1433 = vmatprep.subr.bf16.mxu0 %v517
    %1434 = vmatpush1.bf16.msra.mxu0 %v516
    %1435 = vmatprep.subr.bf16.mxu0 %v521
    %1436 = vmatpush1.bf16.msra.mxu0 %v520
    %1437 = vmatprep.subr.bf16.mxu0 %v525
    %1438 = vmatpush1.bf16.msra.mxu0 %v524
    %1439 = vmatprep.subr.bf16.mxu0 %v529
    %1440 = vmatpush1.bf16.msra.mxu0 %v528
    %1441 = vmatprep.subr.bf16.mxu0 0
    %1442 = vmatpush1.bf16.msra.mxu0 0
    %1443 = vmatprep.subr.bf16.mxu0 0
    %1444 = vmatpush1.bf16.msra.mxu0 0
    %1445 = vmatprep.subr.bf16.mxu0 0
    %1446 = vmatpush1.bf16.msra.mxu0 0
    %1447 = vmatprep.subr.bf16.mxu0 0
    %1448 = vmatpush1.bf16.msra.mxu0 0
    %1449 = vmatprep.subr.bf16.mxu0 0
    %1450 = vmatpush1.bf16.msra.mxu0 0
    %1451 = vmatprep.subr.bf16.mxu0 0
    %1452 = vmatpush1.bf16.msra.mxu0 0
    %1453 = vmatprep.subr.bf16.mxu0 0
    %1454 = vmatpush1.bf16.msra.mxu0 0
    %1455 = vmatprep.subr.bf16.mxu0 0
    %1456 = vmatpush1.bf16.msra.mxu0 0
    %1457 = vmatprep.mubr.bf16.mxu0 0
    %1458 = vmatmul.mubr.bf16.gmra.mrb[0].mxu0 %v1424
    %v1459 = vpop.f32.mrb[0].mxu0
    %v1460 = vadd.f32 0.0, %v1459
    %v1461 = vpop.f32.mrb[0].mxu0
    %v1462 = vadd.f32 0.0, %v1461
    %v1463 = vpop.f32.mrb[0].mxu0
    %v1464 = vpop.f32.mrb[0].mxu0
    %1465 = vdwg.mxu0
    %1466 = vmatprep.subr.bf16.mxu0 %v503
    %1467 = vmatpush1.bf16.msra.mxu0 %v502
    %1468 = vmatprep.subr.bf16.mxu0 %v507
    %1469 = vmatpush1.bf16.msra.mxu0 %v506
    %1470 = vmatprep.subr.bf16.mxu0 %v511
    %1471 = vmatpush1.bf16.msra.mxu0 %v510
    %1472 = vmatprep.subr.bf16.mxu0 %v515
    %1473 = vmatpush1.bf16.msra.mxu0 %v514
    %1474 = vmatprep.subr.bf16.mxu0 %v519
    %1475 = vmatpush1.bf16.msra.mxu0 %v518
    %1476 = vmatprep.subr.bf16.mxu0 %v523
    %1477 = vmatpush1.bf16.msra.mxu0 %v522
    %1478 = vmatprep.subr.bf16.mxu0 %v527
    %1479 = vmatpush1.bf16.msra.mxu0 %v526
    %1480 = vmatprep.subr.bf16.mxu0 %v531
    %1481 = vmatpush1.bf16.msra.mxu0 %v530
    %1482 = vmatprep.subr.bf16.mxu0 0
    %1483 = vmatpush1.bf16.msra.mxu0 0
    %1484 = vmatprep.subr.bf16.mxu0 0
    %1485 = vmatpush1.bf16.msra.mxu0 0
    %1486 = vmatprep.subr.bf16.mxu0 0
    %1487 = vmatpush1.bf16.msra.mxu0 0
    %1488 = vmatprep.subr.bf16.mxu0 0
    %1489 = vmatpush1.bf16.msra.mxu0 0
    %1490 = vmatprep.subr.bf16.mxu0 0
    %1491 = vmatpush1.bf16.msra.mxu0 0
    %1492 = vmatprep.subr.bf16.mxu0 0
    %1493 = vmatpush1.bf16.msra.mxu0 0
    %1494 = vmatprep.subr.bf16.mxu0 0
    %1495 = vmatpush1.bf16.msra.mxu0 0
    %1496 = vmatprep.subr.bf16.mxu0 0
    %1497 = vmatpush1.bf16.msra.mxu0 0
    %1498 = vmatprep.mubr.bf16.mxu0 0
    %1499 = vmatmul.mubr.bf16.gmra.mrb[0].mxu0 %v1424
    %v1500 = vpop.f32.mrb[0].mxu0
    %v1501 = vadd.f32 0.0, %v1500
    %v1502 = vpop.f32.mrb[0].mxu0
    %v1503 = vadd.f32 0.0, %v1502
    %v1504 = vpop.f32.mrb[0].mxu0
    %v1505 = vpop.f32.mrb[0].mxu0
    %1506 = vdwg.mxu0
    %v1507 = vadd.f32 %v1420, %v1460
    %v1508 = vadd.f32 %v1421, %v1462
    %v1509 = vadd.f32 %v1422, %v1501
    %v1510 = vadd.f32 %v1423, %v1503
    %v1511 = vxor.u32 %v1507, 2147483648
    %v1512 = vxor.u32 %v1508, 2147483648
    %v1513 = vxor.u32 %v1509, 2147483648
    %v1514 = vxor.u32 %v1510, 2147483648
    %v1515 = vmul.f32 %v1511, 1.442695
    %v1516 = vpow.pop %v1515
    %v1517 = vmul.f32 %v1512, 1.442695
    %v1518 = vpow.pop %v1517
    %v1519 = vmul.f32 %v1513, 1.442695
    %v1520 = vpow.pop %v1519
    %v1521 = vmul.f32 %v1514, 1.442695
    %v1522 = vpow.pop %v1521
    %v1523 = vadd.f32 %v1516, 1.0
    %v1524 = vadd.f32 %v1518, 1.0
    %v1525 = vadd.f32 %v1520, 1.0
    %v1526 = vadd.f32 %v1522, 1.0
    %v1527 = vrcp.pop %v1523
    %v1528 = vmul.f32 1.0, %v1527
    %v1529 = vrcp.pop %v1524
    %v1530 = vmul.f32 1.0, %v1529
    %v1531 = vrcp.pop %v1525
    %v1532 = vmul.f32 1.0, %v1531
    %v1533 = vrcp.pop %v1526
    %v1534 = vmul.f32 1.0, %v1533
    %v1535 = vmul.f32 %v1532, 2.0
    %v1536 = vsub.f32 %v1535, 1.0
    %v1537 = vmul.f32 %v1530, %v1416
    %v1538 = vmul.f32 %v1528, %v1536
    %v1539 = vadd.f32 %v1537, %v1538
    %v1540 = vtanh.pop %v1539
    %v1541 = vmul.f32 %v1534, %v1540
    %1542 = vst [vmem:[#allocation3 + $0x38] sm:$0xff] %v1541
    %v1543 = vld [vmem:[#allocation3] sm:$0xff]
    %v1544 = vld [vmem:[#allocation3 + $0x8] sm:$0xff]
    %v1545 = vld [vmem:[#allocation3 + $0x10] sm:$0xff]
    %v1546 = vld [vmem:[#allocation3 + $0x18] sm:$0xff]
    %v1547 = vld [vmem:[#allocation3 + $0x20] sm:$0xff]
    %v1548 = vld [vmem:[#allocation3 + $0x28] sm:$0xff]
    %v1549 = vld [vmem:[#allocation3 + $0x30] sm:$0xff]
    %v1550 = vld [vmem:[#allocation3 + $0x38] sm:$0xff]
    %v1551 = vld [vmem:[#allocation7] sm:$0xff]
    %v1552 = vld [vmem:[#allocation7 + $0x8] sm:$0xff]
    %v1553 = vld [vmem:[#allocation7 + $0x10] sm:$0xff]
    %v1554 = vld [vmem:[#allocation7 + $0x18] sm:$0xff]
    %v1555 = vld [vmem:[#allocation7 + $0x20] sm:$0xff]
    %v1556 = vld [vmem:[#allocation7 + $0x28] sm:$0xff]
    %v1557 = vld [vmem:[#allocation7 + $0x30] sm:$0xff]
    %v1558 = vld [vmem:[#allocation7 + $0x38] sm:$0xff]
    %v1559 = vld [vmem:[#allocation7 + $0x40] sm:$0xff]
    %v1560 = vld [vmem:[#allocation7 + $0x48] sm:$0xff]
    %v1561 = vld [vmem:[#allocation7 + $0x50] sm:$0xff]
    %v1562 = vld [vmem:[#allocation7 + $0x58] sm:$0xff]
    %v1563 = vld [vmem:[#allocation7 + $0x60] sm:$0xff]
    %v1564 = vld [vmem:[#allocation7 + $0x68] sm:$0xff]
    %v1565 = vld [vmem:[#allocation7 + $0x70] sm:$0xff]
    %v1566 = vld [vmem:[#allocation7 + $0x78] sm:$0xff]
    %v1567 = vld [vmem:[%s5] sm:$0x1]
    %v1569 = vlaneseq
    %v1570 = vshrl.u32 %v1569, 7
    %v1571 = vsub.s32 0, %v1570
    %v1572 = vrot.slane %v1567, %v1571
    %1574 = vmatprep.subr.mxu0 0.0
    %1575 = vmatpush1.msra.mxu0 %v1551
    %1576 = vmatprep.subr.mxu0 0.0
    %1577 = vmatpush1.msra.mxu0 %v1552
    %1578 = vmatprep.subr.mxu0 0.0
    %1579 = vmatpush1.msra.mxu0 %v1553
    %1580 = vmatprep.subr.mxu0 0.0
    %1581 = vmatpush1.msra.mxu0 %v1554
    %1582 = vmatprep.subr.mxu0 0.0
    %1583 = vmatpush1.msra.mxu0 %v1555
    %1584 = vmatprep.subr.mxu0 0.0
    %1585 = vmatpush1.msra.mxu0 %v1556
    %1586 = vmatprep.subr.mxu0 0.0
    %1587 = vmatpush1.msra.mxu0 %v1557
    %1588 = vmatprep.subr.mxu0 0.0
    %1589 = vmatpush1.msra.mxu0 %v1558
    %1590 = vmatprep.subr.mxu0 0.0
    %1591 = vmatpush1.msra.mxu0 %v1559
    %1592 = vmatprep.subr.mxu0 0.0
    %1593 = vmatpush1.msra.mxu0 %v1560
    %1594 = vmatprep.subr.mxu0 0.0
    %1595 = vmatpush1.msra.mxu0 %v1561
    %1596 = vmatprep.subr.mxu0 0.0
    %1597 = vmatpush1.msra.mxu0 %v1562
    %1598 = vmatprep.subr.mxu0 0.0
    %1599 = vmatpush1.msra.mxu0 %v1563
    %1600 = vmatprep.subr.mxu0 0.0
    %1601 = vmatpush1.msra.mxu0 %v1564
    %1602 = vmatprep.subr.mxu0 0.0
    %1603 = vmatpush1.msra.mxu0 %v1565
    %1604 = vmatprep.subr.mxu0 0.0
    %1605 = vmatpush1.msra.mxu0 %v1566
    %1606 = vmatprep.subr.mxu0 0.0
    %1607 = vmatpush1.msra.mxu0 0.0
    %1608 = vmatprep.subr.mxu0 0.0
    %1609 = vmatpush1.msra.mxu0 0.0
    %1610 = vmatprep.subr.mxu0 0.0
    %1611 = vmatpush1.msra.mxu0 0.0
    %1612 = vmatprep.subr.mxu0 0.0
    %1613 = vmatpush1.msra.mxu0 0.0
    %1614 = vmatprep.subr.mxu0 0.0
    %1615 = vmatpush1.msra.mxu0 0.0
    %1616 = vmatprep.subr.mxu0 0.0
    %1617 = vmatpush1.msra.mxu0 0.0
    %1618 = vmatprep.subr.mxu0 0.0
    %1619 = vmatpush1.msra.mxu0 0.0
    %1620 = vmatprep.subr.mxu0 0.0
    %1621 = vmatpush1.msra.mxu0 0.0
    %1622 = vmatprep.subr.mxu0 0.0
    %1623 = vmatpush1.msra.mxu0 0.0
    %1624 = vmatprep.subr.mxu0 0.0
    %1625 = vmatpush1.msra.mxu0 0.0
    %1626 = vmatprep.subr.mxu0 0.0
    %1627 = vmatpush1.msra.mxu0 0.0
    %1628 = vmatprep.subr.mxu0 0.0
    %1629 = vmatpush1.msra.mxu0 0.0
    %1630 = vmatprep.subr.mxu0 0.0
    %1631 = vmatpush1.msra.mxu0 0.0
    %1632 = vmatprep.subr.mxu0 0.0
    %1633 = vmatpush1.msra.mxu0 0.0
    %1634 = vmatprep.subr.mxu0 0.0
    %1635 = vmatpush1.msra.mxu0 0.0
    %1636 = vmatprep.subr.mxu0 0.0
    %1637 = vmatpush1.msra.mxu0 0.0
    %1638 = vmatprep.mubr.f32.mxu0 0.0
    %1639 = vmatmul.mubr.f32.gmra.mrb[0].mxu0 %v1543
    %v1640 = vpop.f32.mrb[0].mxu0
    %v1641 = vadd.f32 %v1572, %v1640
    %v1642 = vpop.f32.mrb[0].mxu0
    %1643 = vmatprep.mubr.f32.mxu0 0.0
    %1644 = vmatmul.mubr.f32.gmra.mrb[0].mxu0 %v1544
    %v1645 = vpop.f32.mrb[0].mxu0
    %v1646 = vadd.f32 %v1572, %v1645
    %v1647 = vpop.f32.mrb[0].mxu0
    %1648 = vmatprep.mubr.f32.mxu0 0.0
    %1649 = vmatmul.mubr.f32.gmra.mrb[0].mxu0 %v1545
    %v1650 = vpop.f32.mrb[0].mxu0
    %v1651 = vadd.f32 %v1572, %v1650
    %v1652 = vpop.f32.mrb[0].mxu0
    %1653 = vmatprep.mubr.f32.mxu0 0.0
    %1654 = vmatmul.mubr.f32.gmra.mrb[0].mxu0 %v1546
    %v1655 = vpop.f32.mrb[0].mxu0
    %v1656 = vadd.f32 %v1572, %v1655
    %v1657 = vpop.f32.mrb[0].mxu0
    %1658 = vmatprep.mubr.f32.mxu0 0.0
    %1659 = vmatmul.mubr.f32.gmra.mrb[0].mxu0 %v1547
    %v1660 = vpop.f32.mrb[0].mxu0
    %v1661 = vadd.f32 %v1572, %v1660
    %v1662 = vpop.f32.mrb[0].mxu0
    %1663 = vmatprep.mubr.f32.mxu0 0.0
    %1664 = vmatmul.mubr.f32.gmra.mrb[0].mxu0 %v1548
    %v1665 = vpop.f32.mrb[0].mxu0
    %v1666 = vadd.f32 %v1572, %v1665
    %v1667 = vpop.f32.mrb[0].mxu0
    %1668 = vmatprep.mubr.f32.mxu0 0.0
    %1669 = vmatmul.mubr.f32.gmra.mrb[0].mxu0 %v1549
    %v1670 = vpop.f32.mrb[0].mxu0
    %v1671 = vadd.f32 %v1572, %v1670
    %v1672 = vpop.f32.mrb[0].mxu0
    %1673 = vmatprep.mubr.f32.mxu0 0.0
    %1674 = vmatmul.mubr.f32.gmra.mrb[0].mxu0 %v1550
    %v1675 = vpop.f32.mrb[0].mxu0
    %v1676 = vadd.f32 %v1572, %v1675
    %v1677 = vpop.f32.mrb[0].mxu0
    %1678 = vdwg.mxu0
    %1679 = vst [vmem:[#allocation9] sm:$0xff] %v1641
    %1680 = vst [vmem:[#allocation9 + $0x8] sm:$0xff] %v1646
    %1681 = vst [vmem:[#allocation9 + $0x10] sm:$0xff] %v1651
    %1682 = vst [vmem:[#allocation9 + $0x18] sm:$0xff] %v1656
    %1683 = vst [vmem:[#allocation9 + $0x20] sm:$0xff] %v1661
    %1684 = vst [vmem:[#allocation9 + $0x28] sm:$0xff] %v1666
    %1685 = vst [vmem:[#allocation9 + $0x30] sm:$0xff] %v1671
    %1686 = vst [vmem:[#allocation9 + $0x38] sm:$0xff] %v1676
    // Predicated region
    $region34: #{tpu_custom_call.1} parent=1 // pred_check
      _
    $region35: #{tpu_custom_call.1} parent=1 // pred_check_branch
      %1688 = sbr.rel (0) target = $region37
    $region36: #{tpu_custom_call.1} parent=1 // pred_region
      %s1690 = ssub.s32 1024, 1024
      %1691 = vsyncadd [#allocation6], %s1690
      %s1692 = sshll.u32 [#allocation9], 4
      %s1693 = int_to_ptr.vmem [resolvable:$true] %s1692
      %1698 = dma.vmem_to_hbm [thread:$0]  %s1693, 1024, %s6, [#allocation6], 128, 128, 8
    $region37: #{tpu_custom_call.1} parent=1 // pred_fallthru
      _
    // Predicated region
    $region38: #{tpu_custom_call.1} parent=1 // pred_check
      _
    $region39: #{tpu_custom_call.1} parent=1 // pred_check_branch
      %1700 = sbr.rel (0) target = $region41
    $region40: #{tpu_custom_call.1} parent=1 // pred_region
      %1701 = dma.done [#allocation6], 1024
    $region41: #{tpu_custom_call.1} parent=1 // pred_fallthru
      _
    %1702 = vsyncpa [#allocation5], 1
    %1703 = vsyncpa [#allocation8], 1
    %1704 = vsyncpa [#allocation6], 1

</llo_original>
